<compile_context>
chip_gen: v7x
topology: tpu7x:2x2x1
jax: 0.10.0
libtpu: 0.0.40
codegen_flags: <defaults>
</compile_context>

<pallas_src>
import jax
import jax.numpy as jnp
from jax.experimental import pallas as pl
from jax.experimental.pallas import tpu as pltpu

NORMALIZATION = ((0.485, 0.456, 0.406), (0.229, 0.224, 0.225))

_TK = 2048                      # K tile for the backbone contraction axis (sweepable)
_LANES = 128                    # all output slabs padded to a multiple of the lane width
_VMEM_LIMIT = 32 * 1024 * 1024  # covers double-buffered (tk, G) weight tiles with margin


def _round_up(x, m):
    return ((x + m - 1) // m) * m


def _k_tiling(K):
    """Single source of truth for the K tiling (used by init_params AND the forward)."""
    tk = min(_TK, _round_up(K, _LANES))
    k_pad = _round_up(K, tk)
    assert k_pad % tk == 0
    return tk, k_pad, k_pad // tk


# ------------------------------- fused kernel -------------------------------

def _make_fused_kernel(G):
    """Kernel closure over the static backbone feature width G."""

    def kernel(x_ref, wb_ref, ws_ref, bb_ref, wp_ref,
               t_ref, w1_ref, b1_ref, w2_ref, b2_ref, w3_ref, bo_ref,
               out_proj_ref, out_feat_ref, acc_ref, ptac_ref):
        k = pl.program_id(0)

        @pl.when(k == 0)
        def _prologue():
            acc_ref[...] = jnp.zeros_like(acc_ref)
            # projector_tac MLP runs here, under the shadow of the first backbone
            # weight-tile DMAs, instead of serializing after the whole K loop.
            t = t_ref[...]                                           # [B, TP] f32 (lane padded)
            h = jnp.dot(t, w1_ref[...], preferred_element_type=jnp.float32) + b1_ref[...]
            h = jnp.maximum(h, 0.0)
            h = jnp.dot(h, w2_ref[...], preferred_element_type=jnp.float32) + b2_ref[...]
            h = jnp.maximum(h, 0.0)
            # w3 / biases are pre-placed into the lane-padded out_proj slab columns,
            # so this already lands p_feat_tac at [:, E:2E] and zeros elsewhere.
            ptac_ref[...] = jnp.dot(h, w3_ref[...],
                                    preferred_element_type=jnp.float32) + bo_ref[...]
            # tac copy into out_feat slab columns [G:]; the pad columns are already zero.
            out_feat_ref[:, G:] = t

        # backbone matmul, K-tiled: int8 weight cast to bf16 in-register (exact),
        # bf16 activations, f32 accumulation on the MXU.  The per-column dequant
        # scale is applied once at finalize, not per tile.
        acc_ref[...] += jnp.dot(x_ref[...], wb_ref[...].astype(jnp.bfloat16),
                                preferred_element_type=jnp.float32)

        @pl.when(k == pl.num_programs(0) - 1)
        def _finalize():
            # dequant + folded T.Normalize bias: feat_img = backbone(preprocess(imag))
            feat = acc_ref[...] * ws_ref[...] + bb_ref[...]          # [B, G] f32
            out_feat_ref[:, :G] = feat
            # projector_img weight is pre-placed at columns [0:E] of the slab, so this
            # single unmasked full-width store fuses p_img, p_tac and torch.cat(..., -1).
            out_proj_ref[...] = ptac_ref[...] + jnp.dot(
                feat, wp_ref[...], preferred_element_type=jnp.float32)

    return kernel


# ------------------------------ host wrappers --------------------------------

def encoder_ve_t_forward(params, imag_nchw, tac, *, emb_dim):
    """Mirrors EncoderVE_T.forward for the 'CLIP'-style branch (en_mode='cls').

    imag_nchw: [B, C, H, W] float in [0, 1]  (NCHW, like the PyTorch module)
    tac:       [B, 20]
    returns (cat([p_feat_img, p_feat_tac], -1), cat([feat_img, tac], 1))
    """
    B, C, H, W = imag_nchw.shape
    K = C * H * W
    tk, K_pad, num_k = _k_tiling(K)

    wb = params["w_backbone_q"]                       # [K_pad, G] int8
    assert wb.shape[0] == K_pad and K_pad % tk == 0, (
        f"K tiling mismatch: weight padded to {wb.shape[0]} but forward derived "
        f"K_pad={K_pad}, tk={tk}; re-run init_params after changing _TK")
    G = wb.shape[1]
    T = tac.shape[1]
    P1 = params["w_out_proj"].shape[1]                # round_up(2*emb_dim, 128)
    TP = params["w_tac1"].shape[0]                    # round_up(G+T, 128) - G
    P2 = G + TP
    assert P1 >= 2 * emb_dim and TP >= T

    # single-pass image prep: reshape -> bf16 -> pad (no intermediate f32 HBM copies)
    x = imag_nchw.reshape(B, K).astype(jnp.bfloat16)
    if K_pad != K:
        x = jnp.pad(x, ((0, 0), (0, K_pad - K)))

    t = tac.astype(jnp.float32)                       # single cast, used everywhere
    if TP != T:
        t = jnp.pad(t, ((0, 0), (0, TP - T)))         # pad cols are killed by zero rows in w1

    kernel = _make_fused_kernel(G)

    out_proj_pad, out_feat_pad = pl.pallas_call(
        kernel,
        out_shape=(jax.ShapeDtypeStruct((B, P1), jnp.float32),
                   jax.ShapeDtypeStruct((B, P2), jnp.float32)),
        grid_spec=pltpu.PrefetchScalarGridSpec(
            num_scalar_prefetch=0,
            grid=(num_k,),
            in_specs=[
                pl.BlockSpec((B, tk), lambda k: (0, k)),      # x (bf16), K-tiled
                pl.BlockSpec((tk, G), lambda k: (k, 0)),      # backbone W (int8), K-tiled
                pl.BlockSpec((1, G), lambda k: (0, 0)),       # per-column dequant scale
                pl.BlockSpec((1, G), lambda k: (0, 0)),       # folded backbone bias
                pl.BlockSpec((G, P1), lambda k: (0, 0)),      # proj_img W placed at cols [0:E]
                pl.BlockSpec((B, TP), lambda k: (0, 0)),      # tac (lane padded)
                pl.BlockSpec((TP, 128), lambda k: (0, 0)),    # tac MLP layer 1 (rows>=20 zero)
                pl.BlockSpec((1, 128), lambda k: (0, 0)),
                pl.BlockSpec((128, 256), lambda k: (0, 0)),   # tac MLP layer 2
                pl.BlockSpec((1, 256), lambda k: (0, 0)),
                pl.BlockSpec((256, P1), lambda k: (0, 0)),    # tac MLP layer 3, cols [E:2E]
                pl.BlockSpec((1, P1), lambda k: (0, 0)),      # combined projector biases
            ],
            out_specs=(pl.BlockSpec((B, P1), lambda k: (0, 0)),
                       pl.BlockSpec((B, P2), lambda k: (0, 0))),
            scratch_shapes=[pltpu.VMEM((B, G), jnp.float32),      # f32 matmul accumulator
                            pltpu.VMEM((B, P1), jnp.float32)],    # staged p_feat_tac slab
        ),
        compiler_params=pltpu.CompilerParams(
            # K is a reduction axis with a resident accumulator -> must be 'arbitrary'
            dimension_semantics=("arbitrary",),
            vmem_limit_bytes=_VMEM_LIMIT),
    )(x, wb, params["w_backbone_scale"], params["b_backbone_folded"],
      params["w_out_proj"], t,
      params["w_tac1"], params["b_tac1"],
      params["w_tac2"], params["b_tac2"],
      params["w_tac3_out"], params["b_out_proj"])

    # both host slices start at lane offset 0 (aligned); no slice at all if 2E == P1
    out_proj = out_proj_pad if P1 == 2 * emb_dim else out_proj_pad[:, :2 * emb_dim]
    out_feat = out_feat_pad[:, :G + T]
    return out_proj, out_feat


def encoder_ve_t_reference(ref, imag_nchw, tac):
    """Pure-JAX f32 reference of the same forward (unfolded, unquantised weights)."""
    B = imag_nchw.shape[0]
    x = imag_nchw.reshape(B, -1).astype(jnp.float32)
    xn = (x - ref["mean_flat"][None, :]) * ref["istd_flat"][None, :]
    feat = xn @ ref["w_backbone"]
    p_img = feat @ ref["w_proj_img"] + ref["b_proj_img"]
    t = tac.astype(jnp.float32)
    h = jnp.maximum(t @ ref["w_tac1"] + ref["b_tac1"], 0.0)
    h = jnp.maximum(h @ ref["w_tac2"] + ref["b_tac2"], 0.0)
    p_tac = h @ ref["w_tac3"] + ref["b_tac3"]
    return (jnp.concatenate([p_img, p_tac], axis=-1),
            jnp.concatenate([feat, t], axis=1))


def init_params(key, C, H, W, gap_dim_img, emb_dim, tac_dim=20):
    K = C * H * W
    tk, K_pad, _ = _k_tiling(K)
    ks = jax.random.split(key, 8)
    mean = jnp.asarray(NORMALIZATION[0], jnp.float32)[:C]
    std = jnp.asarray(NORMALIZATION[1], jnp.float32)[:C]
    mean_flat = jnp.repeat(mean, H * W)            # channel-major NCHW flattening
    istd_flat = jnp.repeat(1.0 / std, H * W)

    def lin(k, fan_in, fan_out):
        return jax.random.normal(k, (fan_in, fan_out), jnp.float32) / jnp.sqrt(fan_in)

    # TODO(synk): deterministic linear stand-in for the pretrained image backbone.
    w_backbone = lin(ks[0], K, gap_dim_img)

    # Fold T.Normalize into the (linear) backbone:
    #   ((x - mean) * istd) @ W == x @ (istd[:, None] * W) + (-(mean * istd) @ W)
    w_fold = w_backbone * istd_flat[:, None]
    b_fold = -(mean_flat * istd_flat) @ w_backbone
    w_fold = jnp.pad(w_fold, ((0, K_pad - K), (0, 0)))   # pad K so the grid tiles it evenly

    # int8 per-output-column quantisation of the streamed weight (halves HBM bytes).
    col_max = jnp.maximum(jnp.max(jnp.abs(w_fold), axis=0, keepdims=True), 1e-8)
    w_scale = (col_max / 127.0).astype(jnp.float32)                      # [1, G]
    w_q = jnp.clip(jnp.round(w_fold / w_scale), -127, 127).astype(jnp.int8)

    # projector parameters
    w_proj_img = lin(ks[1], gap_dim_img, emb_dim)
    b_proj_img = jnp.zeros((emb_dim,), jnp.float32)
    w_tac1 = lin(ks[2], tac_dim, 128)
    b_tac1 = 0.01 * jnp.ones((1, 128), jnp.float32)
    w_tac2 = lin(ks[3], 128, 256)
    b_tac2 = 0.01 * jnp.ones((1, 256), jnp.float32)
    w_tac3 = lin(ks[4], 256, emb_dim)
    b_tac3 = jnp.zeros((emb_dim,), jnp.float32)

    # Pre-place projector weights/biases into the lane-padded out_proj slab
    #   out_proj = [ p_feat_img | p_feat_tac | 0 pad ],  width P1 = round_up(2E, 128)
    # so the in-kernel concat is one unmasked full-width store.
    P1 = _round_up(2 * emb_dim, _LANES)
    w_out_proj = jnp.zeros((gap_dim_img, P1), jnp.float32).at[:, :emb_dim].set(w_proj_img)
    w_tac3_out = jnp.zeros((256, P1), jnp.float32).at[:, emb_dim:2 * emb_dim].set(w_tac3)
    b_out = (jnp.zeros((1, P1), jnp.float32)
             .at[0, :emb_dim].set(b_proj_img)
             .at[0, emb_dim:2 * emb_dim].set(b_tac3))

    # Lane-pad the tac path: out_feat = [ feat | tac | 0 pad ], tac width TP = P2 - G;
    # the padded tac columns are killed by zero rows in the padded first MLP weight.
    TP = _round_up(gap_dim_img + tac_dim, _LANES) - gap_dim_img
    w_tac1_pad = jnp.zeros((TP, 128), jnp.float32).at[:tac_dim, :].set(w_tac1)

    params = {
        "w_backbone_q": w_q,
        "w_backbone_scale": w_scale,
        "b_backbone_folded": b_fold.reshape(1, gap_dim_img).astype(jnp.float32),
        "w_out_proj": w_out_proj,
        "b_out_proj": b_out,
        "w_tac1": w_tac1_pad, "b_tac1": b_tac1,
        "w_tac2": w_tac2, "b_tac2": b_tac2,
        "w_tac3_out": w_tac3_out,
    }
    ref = {
        "w_backbone": w_backbone, "mean_flat": mean_flat, "istd_flat": istd_flat,
        "w_proj_img": w_proj_img, "b_proj_img": b_proj_img,
        "w_tac1": w_tac1, "b_tac1": b_tac1, "w_tac2": w_tac2, "b_tac2": b_tac2,
        "w_tac3": w_tac3, "b_tac3": b_tac3,
    }
    return params, ref


if __name__ == "__main__":
    key = jax.random.PRNGKey(0)
    k_img, k_tac, k_param = jax.random.split(key, 3)

    # small demo shapes: K = 3*32*32 = 3072 -> 2 K-tiles of 2048 (exercises the
    # accumulate path with prologue/finalize on different grid steps)
    B, C, H, W = 2, 3, 32, 32
    gap_dim_img = 128          # lane-aligned stand-in backbone feature width
    emb_dim = 64
    tac_dim = 20

    imag = jax.random.uniform(k_img, (B, C, H, W), jnp.float32)   # NCHW image in [0, 1]
    tac = jax.random.normal(k_tac, (B, tac_dim), jnp.float32)

    params, ref = init_params(k_param, C, H, W, gap_dim_img, emb_dim, tac_dim)

    fwd = jax.jit(encoder_ve_t_forward, static_argnames="emb_dim")
    out_proj, out_feat = fwd(params, imag, tac, emb_dim=emb_dim)
    jax.block_until_ready((out_proj, out_feat))

    assert out_proj.shape == (B, 2 * emb_dim), out_proj.shape
    assert out_feat.shape == (B, gap_dim_img + tac_dim), out_feat.shape
    assert out_proj.dtype == jnp.float32 and out_feat.dtype == jnp.float32

    ref_proj, ref_feat = encoder_ve_t_reference(ref, imag, tac)
    assert bool(jnp.all(jnp.isfinite(out_proj))) and bool(jnp.all(jnp.isfinite(out_feat)))
    # the tac columns of out_feat are a pure copy -> must be bit-exact
    assert bool(jnp.array_equal(out_feat[:, gap_dim_img:], tac))
    # bf16 activations + int8 backbone weight => small, deterministic drift vs f32 reference
    assert float(jnp.max(jnp.abs(out_proj - ref_proj))) < 0.2
    assert float(jnp.max(jnp.abs(out_feat - ref_feat))) < 0.2

    print("KERNEL_OK")
</pallas_src>

<mosaic_0001>
module attributes {stable_mosaic.version = 11 : i64} {
  func.func @kernel(%arg0: i32, %arg1: memref<2x2048xbf16, #tpu.memory_space<vmem>>, %arg2: memref<2048x128xi8, #tpu.memory_space<vmem>>, %arg3: memref<1x128xf32, #tpu.memory_space<vmem>>, %arg4: memref<1x128xf32, #tpu.memory_space<vmem>>, %arg5: memref<128x128xf32, #tpu.memory_space<vmem>>, %arg6: memref<2x128xf32, #tpu.memory_space<vmem>>, %arg7: memref<128x128xf32, #tpu.memory_space<vmem>>, %arg8: memref<1x128xf32, #tpu.memory_space<vmem>>, %arg9: memref<128x256xf32, #tpu.memory_space<vmem>>, %arg10: memref<1x256xf32, #tpu.memory_space<vmem>>, %arg11: memref<256x128xf32, #tpu.memory_space<vmem>>, %arg12: memref<1x128xf32, #tpu.memory_space<vmem>>, %arg13: memref<2x128xf32, #tpu.memory_space<vmem>>, %arg14: memref<2x256xf32, #tpu.memory_space<vmem>>, %arg15: memref<2x128xf32, #tpu.memory_space<vmem>>, %arg16: memref<2x128xf32, #tpu.memory_space<vmem>>) attributes {dimension_semantics = [#tpu.dimension_semantics<arbitrary>], iteration_bounds = array<i64: 2>, scalar_prefetch = 0 : i64, scratch_operands = 2 : i64, tpu.core_type = #tpu.core_type<tc>, window_params = [{transform_indices = @transform_0, window_bounds = array<i64: 2, 2048>}, {transform_indices = @transform_1, window_bounds = array<i64: 2048, 128>}, {pipeline_mode = #tpu.pipeline_mode<synchronous>, transform_indices = @transform_2, window_bounds = array<i64: 1, 128>}, {pipeline_mode = #tpu.pipeline_mode<synchronous>, transform_indices = @transform_3, window_bounds = array<i64: 1, 128>}, {pipeline_mode = #tpu.pipeline_mode<synchronous>, transform_indices = @transform_4, window_bounds = array<i64: 128, 128>}, {pipeline_mode = #tpu.pipeline_mode<synchronous>, transform_indices = @transform_5, window_bounds = array<i64: 2, 128>}, {pipeline_mode = #tpu.pipeline_mode<synchronous>, transform_indices = @transform_6, window_bounds = array<i64: 128, 128>}, {pipeline_mode = #tpu.pipeline_mode<synchronous>, transform_indices = @transform_7, window_bounds = array<i64: 1, 128>}, {pipeline_mode = #tpu.pipeline_mode<synchronous>, transform_indices = @transform_8, window_bounds = array<i64: 128, 256>}, {pipeline_mode = #tpu.pipeline_mode<synchronous>, transform_indices = @transform_9, window_bounds = array<i64: 1, 256>}, {pipeline_mode = #tpu.pipeline_mode<synchronous>, transform_indices = @transform_10, window_bounds = array<i64: 256, 128>}, {pipeline_mode = #tpu.pipeline_mode<synchronous>, transform_indices = @transform_11, window_bounds = array<i64: 1, 128>}, {pipeline_mode = #tpu.pipeline_mode<synchronous>, transform_indices = @transform_12, window_bounds = array<i64: 2, 128>}, {pipeline_mode = #tpu.pipeline_mode<synchronous>, transform_indices = @transform_13, window_bounds = array<i64: 2, 256>}]} {
    %c0_i32 = arith.constant 0 : i32
    %0 = arith.cmpi eq, %arg0, %c0_i32 : i32
    %1 = arith.extui %0 : i1 to i32
    %c0_i32_0 = arith.constant 0 : i32
    %2 = arith.cmpi ne, %1, %c0_i32_0 : i32
    scf.if %2 {
      %cst_9 = arith.constant 0.000000e+00 : f32
      %13 = vector.broadcast %cst_9 : f32 to vector<2x128xf32>
      %c0_10 = arith.constant 0 : index
      %c0_11 = arith.constant 0 : index
      %14 = vector.load %arg15[%c0_10, %c0_11] : memref<2x128xf32, #tpu.memory_space<vmem>>, vector<2x128xf32>
      tpu.vector_store %arg15[%c0_10, %c0_11], %13 {strides = array<i32>} : memref<2x128xf32, #tpu.memory_space<vmem>>, vector<2x128xf32>,
      %c0_12 = arith.constant 0 : index
      %c0_13 = arith.constant 0 : index
      %15 = vector.load %arg6[%c0_12, %c0_13] : memref<2x128xf32, #tpu.memory_space<vmem>>, vector<2x128xf32>
      %c0_14 = arith.constant 0 : index
      %c0_15 = arith.constant 0 : index
      %16 = vector.load %arg7[%c0_14, %c0_15] : memref<128x128xf32, #tpu.memory_space<vmem>>, vector<128x128xf32>
      %cst_16 = arith.constant dense<0.000000e+00> : vector<2x128xf32>
      %17 = tpu.matmul %15, %16, %cst_16 {dimension_numbers = #tpu.dot_dimension_numbers<[1], [0], [0], [1], [0, 0, 1, 1], [], []>} : vector<2x128xf32>, vector<128x128xf32>, vector<2x128xf32> -> vector<2x128xf32>
      %c0_17 = arith.constant 0 : index
      %c0_18 = arith.constant 0 : index
      %18 = vector.load %arg8[%c0_17, %c0_18] : memref<1x128xf32, #tpu.memory_space<vmem>>, vector<1x128xf32>
      %19 = vector.broadcast %18 : vector<1x128xf32> to vector<2x128xf32>
      %20 = arith.addf %17, %19 : vector<2x128xf32>
      %cst_19 = arith.constant 0.000000e+00 : f32
      %21 = vector.broadcast %cst_19 : f32 to vector<2x128xf32>
      %22 = arith.maximumf %20, %21 : vector<2x128xf32>
      %c0_20 = arith.constant 0 : index
      %c0_21 = arith.constant 0 : index
      %23 = vector.load %arg9[%c0_20, %c0_21] : memref<128x256xf32, #tpu.memory_space<vmem>>, vector<128x256xf32>
      %cst_22 = arith.constant dense<0.000000e+00> : vector<2x256xf32>
      %24 = tpu.matmul %22, %23, %cst_22 {dimension_numbers = #tpu.dot_dimension_numbers<[1], [0], [0], [1], [0, 0, 1, 1], [], []>} : vector<2x128xf32>, vector<128x256xf32>, vector<2x256xf32> -> vector<2x256xf32>
      %c0_23 = arith.constant 0 : index
      %c0_24 = arith.constant 0 : index
      %25 = vector.load %arg10[%c0_23, %c0_24] : memref<1x256xf32, #tpu.memory_space<vmem>>, vector<1x256xf32>
      %26 = vector.broadcast %25 : vector<1x256xf32> to vector<2x256xf32>
      %27 = arith.addf %24, %26 : vector<2x256xf32>
      %cst_25 = arith.constant 0.000000e+00 : f32
      %28 = vector.broadcast %cst_25 : f32 to vector<2x256xf32>
      %29 = arith.maximumf %27, %28 : vector<2x256xf32>
      %c0_26 = arith.constant 0 : index
      %c0_27 = arith.constant 0 : index
      %30 = vector.load %arg11[%c0_26, %c0_27] : memref<256x128xf32, #tpu.memory_space<vmem>>, vector<256x128xf32>
      %cst_28 = arith.constant dense<0.000000e+00> : vector<2x128xf32>
      %31 = tpu.matmul %29, %30, %cst_28 {dimension_numbers = #tpu.dot_dimension_numbers<[1], [0], [0], [1], [0, 0, 1, 1], [], []>} : vector<2x256xf32>, vector<256x128xf32>, vector<2x128xf32> -> vector<2x128xf32>
      %c0_29 = arith.constant 0 : index
      %c0_30 = arith.constant 0 : index
      %32 = vector.load %arg12[%c0_29, %c0_30] : memref<1x128xf32, #tpu.memory_space<vmem>>, vector<1x128xf32>
      %33 = vector.broadcast %32 : vector<1x128xf32> to vector<2x128xf32>
      %34 = arith.addf %31, %33 : vector<2x128xf32>
      %c0_31 = arith.constant 0 : index
      %c0_32 = arith.constant 0 : index
      %35 = vector.load %arg16[%c0_31, %c0_32] : memref<2x128xf32, #tpu.memory_space<vmem>>, vector<2x128xf32>
      tpu.vector_store %arg16[%c0_31, %c0_32], %34 {strides = array<i32>} : memref<2x128xf32, #tpu.memory_space<vmem>>, vector<2x128xf32>,
      %c0_33 = arith.constant 0 : index
      %c128 = arith.constant 128 : index
      %36 = vector.load %arg14[%c0_33, %c128] : memref<2x256xf32, #tpu.memory_space<vmem>>, vector<2x128xf32>
      tpu.vector_store %arg14[%c0_33, %c128], %15 {strides = array<i32>} : memref<2x256xf32, #tpu.memory_space<vmem>>, vector<2x128xf32>,
    } else {
    }
    %c0 = arith.constant 0 : index
    %c0_1 = arith.constant 0 : index
    %3 = vector.load %arg15[%c0, %c0_1] : memref<2x128xf32, #tpu.memory_space<vmem>>, vector<2x128xf32>
    %c0_2 = arith.constant 0 : index
    %c0_3 = arith.constant 0 : index
    %4 = vector.load %arg1[%c0_2, %c0_3] : memref<2x2048xbf16, #tpu.memory_space<vmem>>, vector<2x2048xbf16>
    %c0_4 = arith.constant 0 : index
    %c0_5 = arith.constant 0 : index
    %5 = vector.load %arg2[%c0_4, %c0_5] : memref<2048x128xi8, #tpu.memory_space<vmem>>, vector<2048x128xi8>
    %6 = arith.sitofp %5 : vector<2048x128xi8> to vector<2048x128xbf16>
    %cst = arith.constant dense<0.000000e+00> : vector<2x128xf32>
    %7 = tpu.matmul %4, %6, %cst {dimension_numbers = #tpu.dot_dimension_numbers<[1], [0], [0], [1], [0, 0, 1, 1], [], []>} : vector<2x2048xbf16>, vector<2048x128xbf16>, vector<2x128xf32> -> vector<2x128xf32>
    %8 = arith.addf %3, %7 : vector<2x128xf32>
    %c0_6 = arith.constant 0 : index
    %c0_7 = arith.constant 0 : index
    %9 = vector.load %arg15[%c0_6, %c0_7] : memref<2x128xf32, #tpu.memory_space<vmem>>, vector<2x128xf32>
    tpu.vector_store %arg15[%c0_6, %c0_7], %8 {strides = array<i32>} : memref<2x128xf32, #tpu.memory_space<vmem>>, vector<2x128xf32>,
    %c1_i32 = arith.constant 1 : i32
    %10 = arith.cmpi eq, %arg0, %c1_i32 : i32
    %11 = arith.extui %10 : i1 to i32
    %c0_i32_8 = arith.constant 0 : i32
    %12 = arith.cmpi ne, %11, %c0_i32_8 : i32
    scf.if %12 {
      %c0_9 = arith.constant 0 : index
      %c0_10 = arith.constant 0 : index
      %13 = vector.load %arg15[%c0_9, %c0_10] : memref<2x128xf32, #tpu.memory_space<vmem>>, vector<2x128xf32>
      %c0_11 = arith.constant 0 : index
      %c0_12 = arith.constant 0 : index
      %14 = vector.load %arg3[%c0_11, %c0_12] : memref<1x128xf32, #tpu.memory_space<vmem>>, vector<1x128xf32>
      %15 = vector.broadcast %14 : vector<1x128xf32> to vector<2x128xf32>
      %16 = arith.mulf %13, %15 : vector<2x128xf32>
      %c0_13 = arith.constant 0 : index
      %c0_14 = arith.constant 0 : index
      %17 = vector.load %arg4[%c0_13, %c0_14] : memref<1x128xf32, #tpu.memory_space<vmem>>, vector<1x128xf32>
      %18 = vector.broadcast %17 : vector<1x128xf32> to vector<2x128xf32>
      %19 = arith.addf %16, %18 : vector<2x128xf32>
      %c0_15 = arith.constant 0 : index
      %c0_16 = arith.constant 0 : index
      %20 = vector.load %arg14[%c0_15, %c0_16] : memref<2x256xf32, #tpu.memory_space<vmem>>, vector<2x128xf32>
      tpu.vector_store %arg14[%c0_15, %c0_16], %19 {strides = array<i32>} : memref<2x256xf32, #tpu.memory_space<vmem>>, vector<2x128xf32>,
      %c0_17 = arith.constant 0 : index
      %c0_18 = arith.constant 0 : index
      %21 = vector.load %arg16[%c0_17, %c0_18] : memref<2x128xf32, #tpu.memory_space<vmem>>, vector<2x128xf32>
      %c0_19 = arith.constant 0 : index
      %c0_20 = arith.constant 0 : index
      %22 = vector.load %arg5[%c0_19, %c0_20] : memref<128x128xf32, #tpu.memory_space<vmem>>, vector<128x128xf32>
      %cst_21 = arith.constant dense<0.000000e+00> : vector<2x128xf32>
      %23 = tpu.matmul %19, %22, %cst_21 {dimension_numbers = #tpu.dot_dimension_numbers<[1], [0], [0], [1], [0, 0, 1, 1], [], []>} : vector<2x128xf32>, vector<128x128xf32>, vector<2x128xf32> -> vector<2x128xf32>
      %24 = arith.addf %21, %23 : vector<2x128xf32>
      %c0_22 = arith.constant 0 : index
      %c0_23 = arith.constant 0 : index
      %25 = vector.load %arg13[%c0_22, %c0_23] : memref<2x128xf32, #tpu.memory_space<vmem>>, vector<2x128xf32>
      tpu.vector_store %arg13[%c0_22, %c0_23], %24 {strides = array<i32>} : memref<2x128xf32, #tpu.memory_space<vmem>>, vector<2x128xf32>,
    } else {
    }
    return
  }
  func.func @transform_0(%arg0: i32) -> (i32, i32) {
    %c0_i32 = arith.constant 0 : i32
    %c0_i32_0 = arith.constant 0 : i32
    return %c0_i32, %arg0 : i32, i32
  }
  func.func @transform_1(%arg0: i32) -> (i32, i32) {
    %c0_i32 = arith.constant 0 : i32
    %c0_i32_0 = arith.constant 0 : i32
    return %arg0, %c0_i32 : i32, i32
  }
  func.func @transform_2(%arg0: i32) -> (i32, i32) {
    %c0_i32 = arith.constant 0 : i32
    %c0_i32_0 = arith.constant 0 : i32
    %c0_i32_1 = arith.constant 0 : i32
    return %c0_i32, %c0_i32_0 : i32, i32
  }
  func.func @transform_3(%arg0: i32) -> (i32, i32) {
    %c0_i32 = arith.constant 0 : i32
    %c0_i32_0 = arith.constant 0 : i32
    %c0_i32_1 = arith.constant 0 : i32
    return %c0_i32, %c0_i32_0 : i32, i32
  }
  func.func @transform_4(%arg0: i32) -> (i32, i32) {
    %c0_i32 = arith.constant 0 : i32
    %c0_i32_0 = arith.constant 0 : i32
    %c0_i32_1 = arith.constant 0 : i32
    return %c0_i32, %c0_i32_0 : i32, i32
  }
  func.func @transform_5(%arg0: i32) -> (i32, i32) {
    %c0_i32 = arith.constant 0 : i32
    %c0_i32_0 = arith.constant 0 : i32
    %c0_i32_1 = arith.constant 0 : i32
    return %c0_i32, %c0_i32_0 : i32, i32
  }
  func.func @transform_6(%arg0: i32) -> (i32, i32) {
    %c0_i32 = arith.constant 0 : i32
    %c0_i32_0 = arith.constant 0 : i32
    %c0_i32_1 = arith.constant 0 : i32
    return %c0_i32, %c0_i32_0 : i32, i32
  }
  func.func @transform_7(%arg0: i32) -> (i32, i32) {
    %c0_i32 = arith.constant 0 : i32
    %c0_i32_0 = arith.constant 0 : i32
    %c0_i32_1 = arith.constant 0 : i32
    return %c0_i32, %c0_i32_0 : i32, i32
  }
  func.func @transform_8(%arg0: i32) -> (i32, i32) {
    %c0_i32 = arith.constant 0 : i32
    %c0_i32_0 = arith.constant 0 : i32
    %c0_i32_1 = arith.constant 0 : i32
    return %c0_i32, %c0_i32_0 : i32, i32
  }
  func.func @transform_9(%arg0: i32) -> (i32, i32) {
    %c0_i32 = arith.constant 0 : i32
    %c0_i32_0 = arith.constant 0 : i32
    %c0_i32_1 = arith.constant 0 : i32
    return %c0_i32, %c0_i32_0 : i32, i32
  }
  func.func @transform_10(%arg0: i32) -> (i32, i32) {
    %c0_i32 = arith.constant 0 : i32
    %c0_i32_0 = arith.constant 0 : i32
    %c0_i32_1 = arith.constant 0 : i32
    return %c0_i32, %c0_i32_0 : i32, i32
  }
  func.func @transform_11(%arg0: i32) -> (i32, i32) {
    %c0_i32 = arith.constant 0 : i32
    %c0_i32_0 = arith.constant 0 : i32
    %c0_i32_1 = arith.constant 0 : i32
    return %c0_i32, %c0_i32_0 : i32, i32
  }
  func.func @transform_12(%arg0: i32) -> (i32, i32) {
    %c0_i32 = arith.constant 0 : i32
    %c0_i32_0 = arith.constant 0 : i32
    %c0_i32_1 = arith.constant 0 : i32
    return %c0_i32, %c0_i32_0 : i32, i32
  }
  func.func @transform_13(%arg0: i32) -> (i32, i32) {
    %c0_i32 = arith.constant 0 : i32
    %c0_i32_0 = arith.constant 0 : i32
    %c0_i32_1 = arith.constant 0 : i32
    return %c0_i32, %c0_i32_0 : i32, i32
  }
}

</mosaic_0001>

<llo_original>
// kernel: encoder_ve_t_forward.1
$region0: #{encoder_ve_t_forward.1}
  #allocation0 [shape = 'u32[]', space=smem, size = 0x4, offset = 0x4, fixed_abs, tag = 'smem constant byte address 0x4 - core index']
  #allocation1 [shape = 'u32[144,128]{1,0:T(1,128)}', space=vmem, size = 0x12000, scoped, tag = 'internal scratch']
  #allocation2 [shape = 'f32[2,128]{1,0:T(2,128)}', space=vmem, size = 0x400, scoped, tag = 'scratch operand']
  #allocation3 [shape = 'f32[2,128]{1,0:T(2,128)}', space=vmem, size = 0x400, scoped, tag = 'scratch operand']
  %s0 = inlined_call_operand.vmem [shape: bf16[2,4096], index: 0, kind: input, shape index: {}]
  %s1 = inlined_call_operand.hbm [shape: s8[4096,128], index: 1, kind: input, shape index: {}]
  %s2 = inlined_call_operand.vmem [shape: f32[1,128], index: 2, kind: input, shape index: {}]
  %s3 = inlined_call_operand.vmem [shape: f32[1,128], index: 3, kind: input, shape index: {}]
  %s4 = inlined_call_operand.vmem [shape: f32[128,128], index: 4, kind: input, shape index: {}]
  %s5 = inlined_call_operand.vmem [shape: f32[2,128], index: 5, kind: input, shape index: {}]
  %s6 = inlined_call_operand.hbm [shape: f32[128,128], index: 6, kind: input, shape index: {}]
  %s7 = inlined_call_operand.vmem [shape: f32[1,128], index: 7, kind: input, shape index: {}]
  %s8 = inlined_call_operand.vmem [shape: f32[128,256], index: 8, kind: input, shape index: {}]
  %s9 = inlined_call_operand.vmem [shape: f32[1,256], index: 9, kind: input, shape index: {}]
  %s10 = inlined_call_operand.hbm [shape: f32[256,128], index: 10, kind: input, shape index: {}]
  %s11 = inlined_call_operand.vmem [shape: f32[1,128], index: 11, kind: input, shape index: {}]
  %s12 = inlined_call_operand.hbm [shape: f32[2,128], index: 12, kind: output, shape index: {0}]
  %s13 = inlined_call_operand.hbm [shape: f32[2,256], index: 13, kind: output, shape index: {1}]
  %14 = xla_tuple %s12, %s13
  %s15 = sld [smem:[#allocation0]]
  $region109: #{encoder_ve_t_forward.1} parent=0
    _
  %s17 = ssub.s32 1, %s15
  %s18 = scalar_select 0, %s17, %s15
  $region1: #{encoder_ve_t_forward.1} parent=0
    #allocation4 [shape = 'u8[524288]{0}', space=vmem, size = 0x80000, scoped, tag = 'input window, operand 1']
    #allocation5 [shape = 's32[2]{0}', space=sflag, size = 0x8, scoped, tag = 'scoped memory for encoder_ve_t_forward.1']
    #allocation6 [shape = 's32[2]{0}', space=sflag, size = 0x8, scoped, tag = 'scoped memory for encoder_ve_t_forward.1']
    #allocation7 [shape = 'u8[65536]{0}', space=vmem, size = 0x10000, scoped, tag = 'input window, operand 6, single buffered']
    #allocation8 [shape = 's32[1]{0}', space=sflag, size = 0x4, scoped, tag = 'scoped memory for encoder_ve_t_forward.1']
    #allocation9 [shape = 'u8[131072]{0}', space=vmem, size = 0x20000, scoped, tag = 'input window, operand 10, single buffered']
    #allocation10 [shape = 'u8[1024]{0}', space=vmem, size = 0x400, scoped, tag = 'output window, operand 0, single buffered']
    #allocation11 [shape = 'u8[2048]{0}', space=vmem, size = 0x800, scoped, tag = 'output window, operand 1, single buffered']
    #allocation12 [shape = 's32[1]{0}', space=sflag, size = 0x4, scoped, tag = 'scoped memory for encoder_ve_t_forward.1']
    %19 = vsyncpa [#allocation5], 0
    %s20 = scalar_lea.sflag [#allocation5], 1
    %21 = vsyncpa %s20, 0
    %22 = vsyncpa [#allocation8], 0
    %23 = vsyncpa [#allocation6], 0
    %24 = vsyncpa [#allocation12], 0
    loop: start=0, step=1, limit=4
    $region2: #{encoder_ve_t_forward.1} parent=1 // loop_pre_header
      _
    $region3: #{encoder_ve_t_forward.1} parent=1 // loop_header
      %s26 = sphi 0, %s30
      %p27 = scmp.ge.s32.totalorder %s26, 4
      %s36 = sphi 0, %s38
      %s39 = sphi 0, %s36
      %s40 = sphi 0, %s39
      %s56 = sphi 0, %s40
      %s62 = sphi 0, %s64
      %s65 = sphi 0, %s62
      %s66 = sphi 0, %s65
      %s82 = sphi 0, %s66
      %s86 = sphi 0, %s86
      %s88 = sphi 0, %s86
      %s89 = sphi 0, %s88
      %s103 = sphi 0, %s89
      %s107 = sphi 0, %s107
      %s109 = sphi 0, %s107
      %s110 = sphi 0, %s109
      %s124 = sphi 0, %s110
      %s128 = sphi 0, %s128
      %s130 = sphi 0, %s128
      %s131 = sphi 0, %s130
      %s145 = sphi 0, %s131
      %s149 = sphi 0, %s149
      %s151 = sphi 0, %s149
      %s152 = sphi 0, %s151
      %s166 = sphi 0, %s152
      %s170 = sphi 0, %s170
      %s172 = sphi 0, %s170
      %s173 = sphi 0, %s172
      %s187 = sphi 0, %s173
      %s191 = sphi 0, %s191
      %s193 = sphi 0, %s191
      %s194 = sphi 0, %s193
      %s208 = sphi 0, %s194
      %s212 = sphi 0, %s212
      %s214 = sphi 0, %s212
      %s215 = sphi 0, %s214
      %s229 = sphi 0, %s215
      %s233 = sphi 0, %s233
      %s235 = sphi 0, %s233
      %s236 = sphi 0, %s235
      %s250 = sphi 0, %s236
      %s254 = sphi 0, %s254
      %s256 = sphi 0, %s254
      %s257 = sphi 0, %s256
      %s271 = sphi 0, %s257
      %s275 = sphi 0, %s275
      %s277 = sphi 0, %s275
      %s278 = sphi 0, %s277
      %s292 = sphi 0, %s278
      %s296 = sphi 0, %s296
      %s298 = sphi 0, %s296
      %s299 = sphi 0, %s298
      %s313 = sphi 0, %s299
      %s317 = sphi 0, %s317
      %s319 = sphi 0, %s317
      %s320 = sphi 0, %s319
      %s334 = sphi 0, %s320
    $region4: #{encoder_ve_t_forward.1} parent=1 // loop_header_branch
      %29 = sbr.rel (%p27) target = $region8
    $region5: #{encoder_ve_t_forward.1} parent=1 // loop_body
      %s31 = ssub.s32 %s26, 1
      %s32 = ssub.s32 %s26, 2
      %s33 = sadd.s32 %s26, 1
      %s34 = ssub.s32 %s26, %s33
      %p35 = scmp.eq.s32.totalorder %s34, 0
      %s37 = sadd.s32 %s36, 1
      %s38 = scalar_select %p35, %s36, %s37
      %p41 = pneg %p35
      %p42 = scmp.eq.s32.totalorder %s26, 1
      %p43 = por %p41, %p42
      %p44 = scmp.ne.s32.totalorder %s36, %s39
      %p45 = scmp.eq.s32.totalorder %s26, 0
      %p46 = por %p44, %p45
      %p47 = scmp.ne.s32.totalorder %s36, %s39
      %p48 = scmp.eq.s32.totalorder %s31, 1
      %p49 = por %p47, %p48
      %p50 = scmp.ne.s32.totalorder %s39, %s40
      %p51 = scmp.eq.s32.totalorder %s31, 0
      %p52 = por %p50, %p51
      %p53 = scmp.ne.s32.totalorder %s39, %s40
      %p54 = scmp.eq.s32.totalorder %s32, 1
      %p55 = por %p53, %p54
      %p57 = scmp.ne.s32.totalorder %s40, %s56
      %p58 = scmp.eq.s32.totalorder %s32, 0
      %p59 = por %p57, %p58
      %s60 = ssub.s32 %s26, %s33
      %p61 = scmp.eq.s32.totalorder %s60, 0
      %s63 = sadd.s32 %s62, 1
      %s64 = scalar_select %p61, %s62, %s63
      %p67 = pneg %p61
      %p68 = scmp.eq.s32.totalorder %s26, 1
      %p69 = por %p67, %p68
      %p70 = scmp.ne.s32.totalorder %s62, %s65
      %p71 = scmp.eq.s32.totalorder %s26, 0
      %p72 = por %p70, %p71
      %p73 = scmp.ne.s32.totalorder %s62, %s65
      %p74 = scmp.eq.s32.totalorder %s31, 1
      %p75 = por %p73, %p74
      %p76 = scmp.ne.s32.totalorder %s65, %s66
      %p77 = scmp.eq.s32.totalorder %s31, 0
      %p78 = por %p76, %p77
      %p79 = scmp.ne.s32.totalorder %s65, %s66
      %p80 = scmp.eq.s32.totalorder %s32, 1
      %p81 = por %p79, %p80
      %p83 = scmp.ne.s32.totalorder %s66, %s82
      %p84 = scmp.eq.s32.totalorder %s32, 0
      %p85 = por %p83, %p84
      %s87 = sadd.s32 %s86, 1
      %p90 = scmp.eq.s32.totalorder %s26, 1
      %p91 = scmp.ne.s32.totalorder %s86, %s88
      %p92 = scmp.eq.s32.totalorder %s26, 0
      %p93 = por %p91, %p92
      %p94 = scmp.ne.s32.totalorder %s86, %s88
      %p95 = scmp.eq.s32.totalorder %s31, 1
      %p96 = por %p94, %p95
      %p97 = scmp.ne.s32.totalorder %s88, %s89
      %p98 = scmp.eq.s32.totalorder %s31, 0
      %p99 = por %p97, %p98
      %p100 = scmp.ne.s32.totalorder %s88, %s89
      %p101 = scmp.eq.s32.totalorder %s32, 1
      %p102 = por %p100, %p101
      %p104 = scmp.ne.s32.totalorder %s89, %s103
      %p105 = scmp.eq.s32.totalorder %s32, 0
      %p106 = por %p104, %p105
      %s108 = sadd.s32 %s107, 1
      %p111 = scmp.eq.s32.totalorder %s26, 1
      %p112 = scmp.ne.s32.totalorder %s107, %s109
      %p113 = scmp.eq.s32.totalorder %s26, 0
      %p114 = por %p112, %p113
      %p115 = scmp.ne.s32.totalorder %s107, %s109
      %p116 = scmp.eq.s32.totalorder %s31, 1
      %p117 = por %p115, %p116
      %p118 = scmp.ne.s32.totalorder %s109, %s110
      %p119 = scmp.eq.s32.totalorder %s31, 0
      %p120 = por %p118, %p119
      %p121 = scmp.ne.s32.totalorder %s109, %s110
      %p122 = scmp.eq.s32.totalorder %s32, 1
      %p123 = por %p121, %p122
      %p125 = scmp.ne.s32.totalorder %s110, %s124
      %p126 = scmp.eq.s32.totalorder %s32, 0
      %p127 = por %p125, %p126
      %s129 = sadd.s32 %s128, 1
      %p132 = scmp.eq.s32.totalorder %s26, 1
      %p133 = scmp.ne.s32.totalorder %s128, %s130
      %p134 = scmp.eq.s32.totalorder %s26, 0
      %p135 = por %p133, %p134
      %p136 = scmp.ne.s32.totalorder %s128, %s130
      %p137 = scmp.eq.s32.totalorder %s31, 1
      %p138 = por %p136, %p137
      %p139 = scmp.ne.s32.totalorder %s130, %s131
      %p140 = scmp.eq.s32.totalorder %s31, 0
      %p141 = por %p139, %p140
      %p142 = scmp.ne.s32.totalorder %s130, %s131
      %p143 = scmp.eq.s32.totalorder %s32, 1
      %p144 = por %p142, %p143
      %p146 = scmp.ne.s32.totalorder %s131, %s145
      %p147 = scmp.eq.s32.totalorder %s32, 0
      %p148 = por %p146, %p147
      %s150 = sadd.s32 %s149, 1
      %p153 = scmp.eq.s32.totalorder %s26, 1
      %p154 = scmp.ne.s32.totalorder %s149, %s151
      %p155 = scmp.eq.s32.totalorder %s26, 0
      %p156 = por %p154, %p155
      %p157 = scmp.ne.s32.totalorder %s149, %s151
      %p158 = scmp.eq.s32.totalorder %s31, 1
      %p159 = por %p157, %p158
      %p160 = scmp.ne.s32.totalorder %s151, %s152
      %p161 = scmp.eq.s32.totalorder %s31, 0
      %p162 = por %p160, %p161
      %p163 = scmp.ne.s32.totalorder %s151, %s152
      %p164 = scmp.eq.s32.totalorder %s32, 1
      %p165 = por %p163, %p164
      %p167 = scmp.ne.s32.totalorder %s152, %s166
      %p168 = scmp.eq.s32.totalorder %s32, 0
      %p169 = por %p167, %p168
      %s171 = sadd.s32 %s170, 1
      %p174 = scmp.eq.s32.totalorder %s26, 1
      %p175 = scmp.ne.s32.totalorder %s170, %s172
      %p176 = scmp.eq.s32.totalorder %s26, 0
      %p177 = por %p175, %p176
      %p178 = scmp.ne.s32.totalorder %s170, %s172
      %p179 = scmp.eq.s32.totalorder %s31, 1
      %p180 = por %p178, %p179
      %p181 = scmp.ne.s32.totalorder %s172, %s173
      %p182 = scmp.eq.s32.totalorder %s31, 0
      %p183 = por %p181, %p182
      %p184 = scmp.ne.s32.totalorder %s172, %s173
      %p185 = scmp.eq.s32.totalorder %s32, 1
      %p186 = por %p184, %p185
      %p188 = scmp.ne.s32.totalorder %s173, %s187
      %p189 = scmp.eq.s32.totalorder %s32, 0
      %p190 = por %p188, %p189
      %s192 = sadd.s32 %s191, 1
      %p195 = scmp.eq.s32.totalorder %s26, 1
      %p196 = scmp.ne.s32.totalorder %s191, %s193
      %p197 = scmp.eq.s32.totalorder %s26, 0
      %p198 = por %p196, %p197
      %p199 = scmp.ne.s32.totalorder %s191, %s193
      %p200 = scmp.eq.s32.totalorder %s31, 1
      %p201 = por %p199, %p200
      %p202 = scmp.ne.s32.totalorder %s193, %s194
      %p203 = scmp.eq.s32.totalorder %s31, 0
      %p204 = por %p202, %p203
      %p205 = scmp.ne.s32.totalorder %s193, %s194
      %p206 = scmp.eq.s32.totalorder %s32, 1
      %p207 = por %p205, %p206
      %p209 = scmp.ne.s32.totalorder %s194, %s208
      %p210 = scmp.eq.s32.totalorder %s32, 0
      %p211 = por %p209, %p210
      %s213 = sadd.s32 %s212, 1
      %p216 = scmp.eq.s32.totalorder %s26, 1
      %p217 = scmp.ne.s32.totalorder %s212, %s214
      %p218 = scmp.eq.s32.totalorder %s26, 0
      %p219 = por %p217, %p218
      %p220 = scmp.ne.s32.totalorder %s212, %s214
      %p221 = scmp.eq.s32.totalorder %s31, 1
      %p222 = por %p220, %p221
      %p223 = scmp.ne.s32.totalorder %s214, %s215
      %p224 = scmp.eq.s32.totalorder %s31, 0
      %p225 = por %p223, %p224
      %p226 = scmp.ne.s32.totalorder %s214, %s215
      %p227 = scmp.eq.s32.totalorder %s32, 1
      %p228 = por %p226, %p227
      %p230 = scmp.ne.s32.totalorder %s215, %s229
      %p231 = scmp.eq.s32.totalorder %s32, 0
      %p232 = por %p230, %p231
      %s234 = sadd.s32 %s233, 1
      %p237 = scmp.eq.s32.totalorder %s26, 1
      %p238 = scmp.ne.s32.totalorder %s233, %s235
      %p239 = scmp.eq.s32.totalorder %s26, 0
      %p240 = por %p238, %p239
      %p241 = scmp.ne.s32.totalorder %s233, %s235
      %p242 = scmp.eq.s32.totalorder %s31, 1
      %p243 = por %p241, %p242
      %p244 = scmp.ne.s32.totalorder %s235, %s236
      %p245 = scmp.eq.s32.totalorder %s31, 0
      %p246 = por %p244, %p245
      %p247 = scmp.ne.s32.totalorder %s235, %s236
      %p248 = scmp.eq.s32.totalorder %s32, 1
      %p249 = por %p247, %p248
      %p251 = scmp.ne.s32.totalorder %s236, %s250
      %p252 = scmp.eq.s32.totalorder %s32, 0
      %p253 = por %p251, %p252
      %s255 = sadd.s32 %s254, 1
      %p258 = scmp.eq.s32.totalorder %s26, 1
      %p259 = scmp.ne.s32.totalorder %s254, %s256
      %p260 = scmp.eq.s32.totalorder %s26, 0
      %p261 = por %p259, %p260
      %p262 = scmp.ne.s32.totalorder %s254, %s256
      %p263 = scmp.eq.s32.totalorder %s31, 1
      %p264 = por %p262, %p263
      %p265 = scmp.ne.s32.totalorder %s256, %s257
      %p266 = scmp.eq.s32.totalorder %s31, 0
      %p267 = por %p265, %p266
      %p268 = scmp.ne.s32.totalorder %s256, %s257
      %p269 = scmp.eq.s32.totalorder %s32, 1
      %p270 = por %p268, %p269
      %p272 = scmp.ne.s32.totalorder %s257, %s271
      %p273 = scmp.eq.s32.totalorder %s32, 0
      %p274 = por %p272, %p273
      %s276 = sadd.s32 %s275, 1
      %p279 = scmp.eq.s32.totalorder %s26, 1
      %p280 = scmp.ne.s32.totalorder %s275, %s277
      %p281 = scmp.eq.s32.totalorder %s26, 0
      %p282 = por %p280, %p281
      %p283 = scmp.ne.s32.totalorder %s275, %s277
      %p284 = scmp.eq.s32.totalorder %s31, 1
      %p285 = por %p283, %p284
      %p286 = scmp.ne.s32.totalorder %s277, %s278
      %p287 = scmp.eq.s32.totalorder %s31, 0
      %p288 = por %p286, %p287
      %p289 = scmp.ne.s32.totalorder %s277, %s278
      %p290 = scmp.eq.s32.totalorder %s32, 1
      %p291 = por %p289, %p290
      %p293 = scmp.ne.s32.totalorder %s278, %s292
      %p294 = scmp.eq.s32.totalorder %s32, 0
      %p295 = por %p293, %p294
      %s297 = sadd.s32 %s296, 1
      %p300 = scmp.eq.s32.totalorder %s26, 1
      %p301 = scmp.ne.s32.totalorder %s296, %s298
      %p302 = scmp.eq.s32.totalorder %s26, 0
      %p303 = por %p301, %p302
      %p304 = scmp.ne.s32.totalorder %s296, %s298
      %p305 = scmp.eq.s32.totalorder %s31, 1
      %p306 = por %p304, %p305
      %p307 = scmp.ne.s32.totalorder %s298, %s299
      %p308 = scmp.eq.s32.totalorder %s31, 0
      %p309 = por %p307, %p308
      %p310 = scmp.ne.s32.totalorder %s298, %s299
      %p311 = scmp.eq.s32.totalorder %s32, 1
      %p312 = por %p310, %p311
      %p314 = scmp.ne.s32.totalorder %s299, %s313
      %p315 = scmp.eq.s32.totalorder %s32, 0
      %p316 = por %p314, %p315
      %s318 = sadd.s32 %s317, 1
      %p321 = scmp.eq.s32.totalorder %s26, 1
      %p322 = scmp.ne.s32.totalorder %s317, %s319
      %p323 = scmp.eq.s32.totalorder %s26, 0
      %p324 = por %p322, %p323
      %p325 = scmp.ne.s32.totalorder %s317, %s319
      %p326 = scmp.eq.s32.totalorder %s31, 1
      %p327 = por %p325, %p326
      %p328 = scmp.ne.s32.totalorder %s319, %s320
      %p329 = scmp.eq.s32.totalorder %s31, 0
      %p330 = por %p328, %p329
      %p331 = scmp.ne.s32.totalorder %s319, %s320
      %p332 = scmp.eq.s32.totalorder %s32, 1
      %p333 = por %p331, %p332
      %p335 = scmp.ne.s32.totalorder %s320, %s334
      %p336 = scmp.eq.s32.totalorder %s32, 0
      %p337 = por %p335, %p336
      %p338 = scmp.le.s32.totalorder 1, %s26
      %p339 = scmp.lt.s32.totalorder %s26, 3
      %p340 = pnand %p338, %p339
      %p341 = pneg %p340
      // Predicated region
      $region9: #{encoder_ve_t_forward.1} parent=5 // pred_check
        _
      $region10: #{encoder_ve_t_forward.1} parent=5 // pred_check_branch
        %343 = sbr.rel (%p340) target = $region12
      $region11: #{encoder_ve_t_forward.1} parent=5 // pred_region
        %s344 = ssub.s32 %s26, 1
        // Predicated region
        $region13: #{encoder_ve_t_forward.1} parent=11 // pred_check
          %p345 = pneg %p99
        $region14: #{encoder_ve_t_forward.1} parent=11 // pred_check_branch
          %347 = sbr.rel (%p345) target = $region16
        $region15: #{encoder_ve_t_forward.1} parent=11 // pred_region
          _
        $region16: #{encoder_ve_t_forward.1} parent=11 // pred_fallthru
          _
        // Predicated region
        $region17: #{encoder_ve_t_forward.1} parent=11 // pred_check
          %p348 = pneg %p120
        $region18: #{encoder_ve_t_forward.1} parent=11 // pred_check_branch
          %350 = sbr.rel (%p348) target = $region20
        $region19: #{encoder_ve_t_forward.1} parent=11 // pred_region
          _
        $region20: #{encoder_ve_t_forward.1} parent=11 // pred_fallthru
          _
        // Predicated region
        $region21: #{encoder_ve_t_forward.1} parent=11 // pred_check
          %p351 = pneg %p141
        $region22: #{encoder_ve_t_forward.1} parent=11 // pred_check_branch
          %353 = sbr.rel (%p351) target = $region24
        $region23: #{encoder_ve_t_forward.1} parent=11 // pred_region
          _
        $region24: #{encoder_ve_t_forward.1} parent=11 // pred_fallthru
          _
        // Predicated region
        $region25: #{encoder_ve_t_forward.1} parent=11 // pred_check
          %p354 = pneg %p162
        $region26: #{encoder_ve_t_forward.1} parent=11 // pred_check_branch
          %356 = sbr.rel (%p354) target = $region28
        $region27: #{encoder_ve_t_forward.1} parent=11 // pred_region
          _
        $region28: #{encoder_ve_t_forward.1} parent=11 // pred_fallthru
          _
        // Predicated region
        $region29: #{encoder_ve_t_forward.1} parent=11 // pred_check
          %p357 = pneg %p183
        $region30: #{encoder_ve_t_forward.1} parent=11 // pred_check_branch
          %359 = sbr.rel (%p357) target = $region32
        $region31: #{encoder_ve_t_forward.1} parent=11 // pred_region
          %s361 = ssub.s32 2048, 2048
          %362 = vsyncadd [#allocation8], %s361
          %s363 = sshll.u32 [#allocation7], 4
          %s364 = int_to_ptr.vmem [resolvable:$true] %s363
          %369 = dma.hbm_to_vmem [thread:$0]  %s6, 2048, %s364, [#allocation8], 128, 128, 8
        $region32: #{encoder_ve_t_forward.1} parent=11 // pred_fallthru
          _
        // Predicated region
        $region33: #{encoder_ve_t_forward.1} parent=11 // pred_check
          %p370 = pneg %p204
        $region34: #{encoder_ve_t_forward.1} parent=11 // pred_check_branch
          %372 = sbr.rel (%p370) target = $region36
        $region35: #{encoder_ve_t_forward.1} parent=11 // pred_region
          _
        $region36: #{encoder_ve_t_forward.1} parent=11 // pred_fallthru
          _
        // Predicated region
        $region37: #{encoder_ve_t_forward.1} parent=11 // pred_check
          %p373 = pneg %p225
        $region38: #{encoder_ve_t_forward.1} parent=11 // pred_check_branch
          %375 = sbr.rel (%p373) target = $region40
        $region39: #{encoder_ve_t_forward.1} parent=11 // pred_region
          _
        $region40: #{encoder_ve_t_forward.1} parent=11 // pred_fallthru
          _
        // Predicated region
        $region41: #{encoder_ve_t_forward.1} parent=11 // pred_check
          %p376 = pneg %p246
        $region42: #{encoder_ve_t_forward.1} parent=11 // pred_check_branch
          %378 = sbr.rel (%p376) target = $region44
        $region43: #{encoder_ve_t_forward.1} parent=11 // pred_region
          _
        $region44: #{encoder_ve_t_forward.1} parent=11 // pred_fallthru
          _
        // Predicated region
        $region45: #{encoder_ve_t_forward.1} parent=11 // pred_check
          %p379 = pneg %p267
        $region46: #{encoder_ve_t_forward.1} parent=11 // pred_check_branch
          %381 = sbr.rel (%p379) target = $region48
        $region47: #{encoder_ve_t_forward.1} parent=11 // pred_region
          %s383 = ssub.s32 4096, 4096
          %384 = vsyncadd [#allocation8], %s383
          %s385 = sshll.u32 [#allocation9], 4
          %s386 = int_to_ptr.vmem [resolvable:$true] %s385
          %391 = dma.hbm_to_vmem [thread:$0]  %s10, 4096, %s386, [#allocation8], 128, 128, 8
        $region48: #{encoder_ve_t_forward.1} parent=11 // pred_fallthru
          _
        // Predicated region
        $region49: #{encoder_ve_t_forward.1} parent=11 // pred_check
          %p392 = pneg %p288
        $region50: #{encoder_ve_t_forward.1} parent=11 // pred_check_branch
          %394 = sbr.rel (%p392) target = $region52
        $region51: #{encoder_ve_t_forward.1} parent=11 // pred_region
          _
        $region52: #{encoder_ve_t_forward.1} parent=11 // pred_fallthru
          _
      $region12: #{encoder_ve_t_forward.1} parent=5 // pred_fallthru
        _
      %p395 = scmp.lt.s32.totalorder %s26, 2
      // Predicated region
      $region53: #{encoder_ve_t_forward.1} parent=5 // pred_check
        %p396 = pneg %p395
      $region54: #{encoder_ve_t_forward.1} parent=5 // pred_check_branch
        %398 = sbr.rel (%p396) target = $region56
      $region55: #{encoder_ve_t_forward.1} parent=5 // pred_region
        // Predicated region
        $region57: #{encoder_ve_t_forward.1} parent=55 // pred_check
          %p399 = pneg %p46
        $region58: #{encoder_ve_t_forward.1} parent=55 // pred_check_branch
          %401 = sbr.rel (%p399) target = $region60
        $region59: #{encoder_ve_t_forward.1} parent=55 // pred_region
          %s402 = smul.u32 16, %s26
          %p403 = scmp.lt.s32.totalorder %s402, 31
          %s404 = scalar_select %p403, %s402, 31
          %s405 = scalar_lea.vmem %s0, %s404
          %s406 = smul.u32 16, %s26
        $region60: #{encoder_ve_t_forward.1} parent=55 // pred_fallthru
          _
        // Predicated region
        $region61: #{encoder_ve_t_forward.1} parent=55 // pred_check
          %p407 = pneg %p72
        $region62: #{encoder_ve_t_forward.1} parent=55 // pred_check_branch
          %409 = sbr.rel (%p407) target = $region64
        $region63: #{encoder_ve_t_forward.1} parent=55 // pred_region
          %s410 = sand.u32 %s62, 1
          %s411 = scalar_lea.sflag [#allocation5], %s410
          %s412 = sand.u32 %s62, 1
          %s413 = smul.addr %s412, 512
          %s414 = scalar_lea.vmem [#allocation4], %s413
          %s415 = smul.u32 64, %s26
          %s417 = ssub.s32 8192, 8192
          %418 = vsyncadd %s411, %s417
          %s419 = smul.addr %s415, 128
          %s420 = scalar_lea.hbm %s1, %s419
          %s421 = sshll.u32 %s414, 4
          %s422 = int_to_ptr.vmem [resolvable:$true] %s421
          %427 = dma.hbm_to_vmem [thread:$0]  %s420, 8192, %s422, %s411, 128, 128, 8
        $region64: #{encoder_ve_t_forward.1} parent=55 // pred_fallthru
          _
      $region56: #{encoder_ve_t_forward.1} parent=5 // pred_fallthru
        _
      %p428 = scmp.le.s32.totalorder 1, %s26
      %p429 = scmp.lt.s32.totalorder %s26, 3
      %p430 = pnand %p428, %p429
      %p431 = pneg %p430
      // Predicated region
      $region65: #{encoder_ve_t_forward.1} parent=5 // pred_check
        _
      $region66: #{encoder_ve_t_forward.1} parent=5 // pred_check_branch
        %433 = sbr.rel (%p430) target = $region68
      $region67: #{encoder_ve_t_forward.1} parent=5 // pred_region
        %s434 = ssub.s32 %s26, 1
        %s435 = sand.u32 %s65, 1
        %s436 = scalar_lea.sflag [#allocation5], %s435
        %s437 = sand.u32 %s65, 1
        %s438 = smul.addr %s437, 512
        %s439 = scalar_lea.vmem [#allocation4], %s438
        // Predicated region
        $region69: #{encoder_ve_t_forward.1} parent=67 // pred_check
          %p440 = pneg %p78
        $region70: #{encoder_ve_t_forward.1} parent=67 // pred_check_branch
          %442 = sbr.rel (%p440) target = $region72
        $region71: #{encoder_ve_t_forward.1} parent=67 // pred_region
          %443 = dma.done %s436, 8192
        $region72: #{encoder_ve_t_forward.1} parent=67 // pred_fallthru
          _
        // Predicated region
        $region73: #{encoder_ve_t_forward.1} parent=67 // pred_check
          %p444 = pneg %p183
        $region74: #{encoder_ve_t_forward.1} parent=67 // pred_check_branch
          %446 = sbr.rel (%p444) target = $region76
        $region75: #{encoder_ve_t_forward.1} parent=67 // pred_region
          %447 = dma.done [#allocation8], 2048
        $region76: #{encoder_ve_t_forward.1} parent=67 // pred_fallthru
          _
        // Predicated region
        $region77: #{encoder_ve_t_forward.1} parent=67 // pred_check
          %p448 = pneg %p267
        $region78: #{encoder_ve_t_forward.1} parent=67 // pred_check_branch
          %450 = sbr.rel (%p448) target = $region80
        $region79: #{encoder_ve_t_forward.1} parent=67 // pred_region
          %451 = dma.done [#allocation8], 4096
        $region80: #{encoder_ve_t_forward.1} parent=67 // pred_fallthru
          _
        %s452 = smul.u32 16, %s31
        %p453 = scmp.lt.s32.totalorder %s452, 31
        %s454 = scalar_select %p453, %s452, 31
        %s455 = scalar_lea.vmem %s0, %s454
        %p456 = pneg %p52
        %p457 = pneg %p49
        %s458 = sand.u32 %s65, 1
        %s459 = scalar_lea.sflag [#allocation5], %s458
        %s460 = sand.u32 %s65, 1
        %s461 = smul.addr %s460, 512
        %s462 = scalar_lea.vmem [#allocation4], %s461
        %p463 = pneg %p78
        %p464 = pneg %p75
        %p465 = pneg %p99
        %p466 = pneg %p96
        %p467 = pneg %p120
        %p468 = pneg %p117
        %p469 = pneg %p141
        %p470 = pneg %p138
        %p471 = pneg %p162
        %p472 = pneg %p159
        %p473 = pneg %p183
        %p474 = pneg %p180
        %p475 = pneg %p204
        %p476 = pneg %p201
        %p477 = pneg %p225
        %p478 = pneg %p222
        %p479 = pneg %p246
        %p480 = pneg %p243
        %p481 = pneg %p267
        %p482 = pneg %p264
        %p483 = pneg %p288
        %p484 = pneg %p285
        %p485 = pneg %p309
        %p486 = pneg %p306
        %p487 = pneg %p330
        %p488 = pneg %p327
        %s489 = smul.u32 16, %s31
        %p490 = scmp.lt.s32.totalorder %s489, 31
        %s491 = scalar_select %p490, %s489, 31
        %s492 = scalar_lea.vmem %s0, %s491
        %s493 = smul.u32 16, %s31
        %s494 = smul.u32 64, %s31
        %p496 = scmp.eq.s32.totalorder %s31, 0
        // Predicated region
        $region81: #{encoder_ve_t_forward.1} parent=67 // pred_check
          %p497 = pneg %p496
        $region82: #{encoder_ve_t_forward.1} parent=67 // pred_check_branch
          %499 = sbr.rel (%p497) target = $region84
        $region83: #{encoder_ve_t_forward.1} parent=67 // pred_region
          %500 = vst [vmem:[#allocation2] sm:$0x3] 0.0
          %v501 = vld [vmem:[%s5] sm:$0x3]
          %v502 = vld [vmem:[#allocation7] sm:$0xff]
          %v503 = vld [vmem:[#allocation7 + $0x8] sm:$0xff]
          %v504 = vld [vmem:[#allocation7 + $0x10] sm:$0xff]
          %v505 = vld [vmem:[#allocation7 + $0x18] sm:$0xff]
          %v506 = vld [vmem:[#allocation7 + $0x20] sm:$0xff]
          %v507 = vld [vmem:[#allocation7 + $0x28] sm:$0xff]
          %v508 = vld [vmem:[#allocation7 + $0x30] sm:$0xff]
          %v509 = vld [vmem:[#allocation7 + $0x38] sm:$0xff]
          %v510 = vld [vmem:[#allocation7 + $0x40] sm:$0xff]
          %v511 = vld [vmem:[#allocation7 + $0x48] sm:$0xff]
          %v512 = vld [vmem:[#allocation7 + $0x50] sm:$0xff]
          %v513 = vld [vmem:[#allocation7 + $0x58] sm:$0xff]
          %v514 = vld [vmem:[#allocation7 + $0x60] sm:$0xff]
          %v515 = vld [vmem:[#allocation7 + $0x68] sm:$0xff]
          %v516 = vld [vmem:[#allocation7 + $0x70] sm:$0xff]
          %v517 = vld [vmem:[#allocation7 + $0x78] sm:$0xff]
          %v518 = vld [vmem:[%s7] sm:$0x1]
          %v520 = vlaneseq
          %v521 = vshrl.u32 %v520, 7
          %v522 = vsub.s32 0, %v521
          %v523 = vrot.slane %v518, %v522
          %525 = vmatprep.subr.mxu0 0.0
          %526 = vmatpush1.msra.mxu0 %v502
          %527 = vmatprep.subr.mxu0 0.0
          %528 = vmatpush1.msra.mxu0 %v503
          %529 = vmatprep.subr.mxu0 0.0
          %530 = vmatpush1.msra.mxu0 %v504
          %531 = vmatprep.subr.mxu0 0.0
          %532 = vmatpush1.msra.mxu0 %v505
          %533 = vmatprep.subr.mxu0 0.0
          %534 = vmatpush1.msra.mxu0 %v506
          %535 = vmatprep.subr.mxu0 0.0
          %536 = vmatpush1.msra.mxu0 %v507
          %537 = vmatprep.subr.mxu0 0.0
          %538 = vmatpush1.msra.mxu0 %v508
          %539 = vmatprep.subr.mxu0 0.0
          %540 = vmatpush1.msra.mxu0 %v509
          %541 = vmatprep.subr.mxu0 0.0
          %542 = vmatpush1.msra.mxu0 %v510
          %543 = vmatprep.subr.mxu0 0.0
          %544 = vmatpush1.msra.mxu0 %v511
          %545 = vmatprep.subr.mxu0 0.0
          %546 = vmatpush1.msra.mxu0 %v512
          %547 = vmatprep.subr.mxu0 0.0
          %548 = vmatpush1.msra.mxu0 %v513
          %549 = vmatprep.subr.mxu0 0.0
          %550 = vmatpush1.msra.mxu0 %v514
          %551 = vmatprep.subr.mxu0 0.0
          %552 = vmatpush1.msra.mxu0 %v515
          %553 = vmatprep.subr.mxu0 0.0
          %554 = vmatpush1.msra.mxu0 %v516
          %555 = vmatprep.subr.mxu0 0.0
          %556 = vmatpush1.msra.mxu0 %v517
          %557 = vmatprep.subr.mxu0 0.0
          %558 = vmatpush1.msra.mxu0 0.0
          %559 = vmatprep.subr.mxu0 0.0
          %560 = vmatpush1.msra.mxu0 0.0
          %561 = vmatprep.subr.mxu0 0.0
          %562 = vmatpush1.msra.mxu0 0.0
          %563 = vmatprep.subr.mxu0 0.0
          %564 = vmatpush1.msra.mxu0 0.0
          %565 = vmatprep.subr.mxu0 0.0
          %566 = vmatpush1.msra.mxu0 0.0
          %567 = vmatprep.subr.mxu0 0.0
          %568 = vmatpush1.msra.mxu0 0.0
          %569 = vmatprep.subr.mxu0 0.0
          %570 = vmatpush1.msra.mxu0 0.0
          %571 = vmatprep.subr.mxu0 0.0
          %572 = vmatpush1.msra.mxu0 0.0
          %573 = vmatprep.subr.mxu0 0.0
          %574 = vmatpush1.msra.mxu0 0.0
          %575 = vmatprep.subr.mxu0 0.0
          %576 = vmatpush1.msra.mxu0 0.0
          %577 = vmatprep.subr.mxu0 0.0
          %578 = vmatpush1.msra.mxu0 0.0
          %579 = vmatprep.subr.mxu0 0.0
          %580 = vmatpush1.msra.mxu0 0.0
          %581 = vmatprep.subr.mxu0 0.0
          %582 = vmatpush1.msra.mxu0 0.0
          %583 = vmatprep.subr.mxu0 0.0
          %584 = vmatpush1.msra.mxu0 0.0
          %585 = vmatprep.subr.mxu0 0.0
          %586 = vmatpush1.msra.mxu0 0.0
          %587 = vmatprep.subr.mxu0 0.0
          %588 = vmatpush1.msra.mxu0 0.0
          %589 = vmatprep.mubr.f32.mxu0 0.0
          %590 = vmatmul.mubr.f32.gmra.mrb[0].mxu0 %v501
          %v591 = vpop.f32.mrb[0].mxu0
          %v592 = vadd.f32 %v523, %v591
          %v593 = vpop.f32.mrb[0].mxu0
          %594 = vdwg.mxu0
          %v595 = vmax.f32 %v592, 0.0
          %v596 = vld [vmem:[%s8] sm:$0xff]
          %v597 = vld [vmem:[%s8 + $0x8] sm:$0xff]
          %v598 = vld [vmem:[%s8 + $0x10] sm:$0xff]
          %v599 = vld [vmem:[%s8 + $0x18] sm:$0xff]
          %v600 = vld [vmem:[%s8 + $0x20] sm:$0xff]
          %v601 = vld [vmem:[%s8 + $0x28] sm:$0xff]
          %v602 = vld [vmem:[%s8 + $0x30] sm:$0xff]
          %v603 = vld [vmem:[%s8 + $0x38] sm:$0xff]
          %v604 = vld [vmem:[%s8 + $0x40] sm:$0xff]
          %v605 = vld [vmem:[%s8 + $0x48] sm:$0xff]
          %v606 = vld [vmem:[%s8 + $0x50] sm:$0xff]
          %v607 = vld [vmem:[%s8 + $0x58] sm:$0xff]
          %v608 = vld [vmem:[%s8 + $0x60] sm:$0xff]
          %v609 = vld [vmem:[%s8 + $0x68] sm:$0xff]
          %v610 = vld [vmem:[%s8 + $0x70] sm:$0xff]
          %v611 = vld [vmem:[%s8 + $0x78] sm:$0xff]
          %v612 = vld [vmem:[%s8 + $0x80] sm:$0xff]
          %v613 = vld [vmem:[%s8 + $0x88] sm:$0xff]
          %v614 = vld [vmem:[%s8 + $0x90] sm:$0xff]
          %v615 = vld [vmem:[%s8 + $0x98] sm:$0xff]
          %v616 = vld [vmem:[%s8 + $0xa0] sm:$0xff]
          %v617 = vld [vmem:[%s8 + $0xa8] sm:$0xff]
          %v618 = vld [vmem:[%s8 + $0xb0] sm:$0xff]
          %v619 = vld [vmem:[%s8 + $0xb8] sm:$0xff]
          %v620 = vld [vmem:[%s8 + $0xc0] sm:$0xff]
          %v621 = vld [vmem:[%s8 + $0xc8] sm:$0xff]
          %v622 = vld [vmem:[%s8 + $0xd0] sm:$0xff]
          %v623 = vld [vmem:[%s8 + $0xd8] sm:$0xff]
          %v624 = vld [vmem:[%s8 + $0xe0] sm:$0xff]
          %v625 = vld [vmem:[%s8 + $0xe8] sm:$0xff]
          %v626 = vld [vmem:[%s8 + $0xf0] sm:$0xff]
          %v627 = vld [vmem:[%s8 + $0xf8] sm:$0xff]
          %v628 = vld [vmem:[%s9] sm:$0x3]
          %v630 = vlaneseq
          %v631 = vshrl.u32 %v630, 7
          %v632 = vsub.s32 0, %v631
          %v633 = vrot.slane %v628, %v632
          %v634 = vlaneseq
          %v635 = vshrl.u32 %v634, 7
          %v636 = vsub.s32 1, %v635
          %v637 = vrot.slane %v628, %v636
          %640 = vmatprep.subr.mxu0 %v597
          %641 = vmatpush1.msra.mxu0 %v596
          %642 = vmatprep.subr.mxu0 %v599
          %643 = vmatpush1.msra.mxu0 %v598
          %644 = vmatprep.subr.mxu0 %v601
          %645 = vmatpush1.msra.mxu0 %v600
          %646 = vmatprep.subr.mxu0 %v603
          %647 = vmatpush1.msra.mxu0 %v602
          %648 = vmatprep.subr.mxu0 %v605
          %649 = vmatpush1.msra.mxu0 %v604
          %650 = vmatprep.subr.mxu0 %v607
          %651 = vmatpush1.msra.mxu0 %v606
          %652 = vmatprep.subr.mxu0 %v609
          %653 = vmatpush1.msra.mxu0 %v608
          %654 = vmatprep.subr.mxu0 %v611
          %655 = vmatpush1.msra.mxu0 %v610
          %656 = vmatprep.subr.mxu0 %v613
          %657 = vmatpush1.msra.mxu0 %v612
          %658 = vmatprep.subr.mxu0 %v615
          %659 = vmatpush1.msra.mxu0 %v614
          %660 = vmatprep.subr.mxu0 %v617
          %661 = vmatpush1.msra.mxu0 %v616
          %662 = vmatprep.subr.mxu0 %v619
          %663 = vmatpush1.msra.mxu0 %v618
          %664 = vmatprep.subr.mxu0 %v621
          %665 = vmatpush1.msra.mxu0 %v620
          %666 = vmatprep.subr.mxu0 %v623
          %667 = vmatpush1.msra.mxu0 %v622
          %668 = vmatprep.subr.mxu0 %v625
          %669 = vmatpush1.msra.mxu0 %v624
          %670 = vmatprep.subr.mxu0 %v627
          %671 = vmatpush1.msra.mxu0 %v626
          %672 = vmatprep.subr.mxu0 0.0
          %673 = vmatpush1.msra.mxu0 0.0
          %674 = vmatprep.subr.mxu0 0.0
          %675 = vmatpush1.msra.mxu0 0.0
          %676 = vmatprep.subr.mxu0 0.0
          %677 = vmatpush1.msra.mxu0 0.0
          %678 = vmatprep.subr.mxu0 0.0
          %679 = vmatpush1.msra.mxu0 0.0
          %680 = vmatprep.subr.mxu0 0.0
          %681 = vmatpush1.msra.mxu0 0.0
          %682 = vmatprep.subr.mxu0 0.0
          %683 = vmatpush1.msra.mxu0 0.0
          %684 = vmatprep.subr.mxu0 0.0
          %685 = vmatpush1.msra.mxu0 0.0
          %686 = vmatprep.subr.mxu0 0.0
          %687 = vmatpush1.msra.mxu0 0.0
          %688 = vmatprep.subr.mxu0 0.0
          %689 = vmatpush1.msra.mxu0 0.0
          %690 = vmatprep.subr.mxu0 0.0
          %691 = vmatpush1.msra.mxu0 0.0
          %692 = vmatprep.subr.mxu0 0.0
          %693 = vmatpush1.msra.mxu0 0.0
          %694 = vmatprep.subr.mxu0 0.0
          %695 = vmatpush1.msra.mxu0 0.0
          %696 = vmatprep.subr.mxu0 0.0
          %697 = vmatpush1.msra.mxu0 0.0
          %698 = vmatprep.subr.mxu0 0.0
          %699 = vmatpush1.msra.mxu0 0.0
          %700 = vmatprep.subr.mxu0 0.0
          %701 = vmatpush1.msra.mxu0 0.0
          %702 = vmatprep.subr.mxu0 0.0
          %703 = vmatpush1.msra.mxu0 0.0
          %704 = vmatprep.mubr.f32.mxu0 0.0
          %705 = vmatmul.mubr.f32.gmra.mrb[0].mxu0 %v595
          %v706 = vpop.f32.mrb[0].mxu0
          %v707 = vadd.f32 %v633, %v706
          %v708 = vpop.f32.mrb[0].mxu0
          %v709 = vadd.f32 %v637, %v708
          %710 = vdwg.mxu0
          %v711 = vmax.f32 %v707, 0.0
          %v712 = vmax.f32 %v709, 0.0
          %v713 = vld [vmem:[#allocation9] sm:$0xff]
          %v714 = vld [vmem:[#allocation9 + $0x8] sm:$0xff]
          %v715 = vld [vmem:[#allocation9 + $0x10] sm:$0xff]
          %v716 = vld [vmem:[#allocation9 + $0x18] sm:$0xff]
          %v717 = vld [vmem:[#allocation9 + $0x20] sm:$0xff]
          %v718 = vld [vmem:[#allocation9 + $0x28] sm:$0xff]
          %v719 = vld [vmem:[#allocation9 + $0x30] sm:$0xff]
          %v720 = vld [vmem:[#allocation9 + $0x38] sm:$0xff]
          %v721 = vld [vmem:[#allocation9 + $0x40] sm:$0xff]
          %v722 = vld [vmem:[#allocation9 + $0x48] sm:$0xff]
          %v723 = vld [vmem:[#allocation9 + $0x50] sm:$0xff]
          %v724 = vld [vmem:[#allocation9 + $0x58] sm:$0xff]
          %v725 = vld [vmem:[#allocation9 + $0x60] sm:$0xff]
          %v726 = vld [vmem:[#allocation9 + $0x68] sm:$0xff]
          %v727 = vld [vmem:[#allocation9 + $0x70] sm:$0xff]
          %v728 = vld [vmem:[#allocation9 + $0x78] sm:$0xff]
          %v729 = vld [vmem:[#allocation9 + $0x80] sm:$0xff]
          %v730 = vld [vmem:[#allocation9 + $0x88] sm:$0xff]
          %v731 = vld [vmem:[#allocation9 + $0x90] sm:$0xff]
          %v732 = vld [vmem:[#allocation9 + $0x98] sm:$0xff]
          %v733 = vld [vmem:[#allocation9 + $0xa0] sm:$0xff]
          %v734 = vld [vmem:[#allocation9 + $0xa8] sm:$0xff]
          %v735 = vld [vmem:[#allocation9 + $0xb0] sm:$0xff]
          %v736 = vld [vmem:[#allocation9 + $0xb8] sm:$0xff]
          %v737 = vld [vmem:[#allocation9 + $0xc0] sm:$0xff]
          %v738 = vld [vmem:[#allocation9 + $0xc8] sm:$0xff]
          %v739 = vld [vmem:[#allocation9 + $0xd0] sm:$0xff]
          %v740 = vld [vmem:[#allocation9 + $0xd8] sm:$0xff]
          %v741 = vld [vmem:[#allocation9 + $0xe0] sm:$0xff]
          %v742 = vld [vmem:[#allocation9 + $0xe8] sm:$0xff]
          %v743 = vld [vmem:[#allocation9 + $0xf0] sm:$0xff]
          %v744 = vld [vmem:[#allocation9 + $0xf8] sm:$0xff]
          %v745 = vld [vmem:[%s11] sm:$0x1]
          %v747 = vlaneseq
          %v748 = vshrl.u32 %v747, 7
          %v749 = vsub.s32 0, %v748
          %v750 = vrot.slane %v745, %v749
          %752 = vmatprep.subr.mxu0 0.0
          %753 = vmatpush1.msra.mxu0 %v713
          %754 = vmatprep.subr.mxu0 0.0
          %755 = vmatpush1.msra.mxu0 %v714
          %756 = vmatprep.subr.mxu0 0.0
          %757 = vmatpush1.msra.mxu0 %v715
          %758 = vmatprep.subr.mxu0 0.0
          %759 = vmatpush1.msra.mxu0 %v716
          %760 = vmatprep.subr.mxu0 0.0
          %761 = vmatpush1.msra.mxu0 %v717
          %762 = vmatprep.subr.mxu0 0.0
          %763 = vmatpush1.msra.mxu0 %v718
          %764 = vmatprep.subr.mxu0 0.0
          %765 = vmatpush1.msra.mxu0 %v719
          %766 = vmatprep.subr.mxu0 0.0
          %767 = vmatpush1.msra.mxu0 %v720
          %768 = vmatprep.subr.mxu0 0.0
          %769 = vmatpush1.msra.mxu0 %v721
          %770 = vmatprep.subr.mxu0 0.0
          %771 = vmatpush1.msra.mxu0 %v722
          %772 = vmatprep.subr.mxu0 0.0
          %773 = vmatpush1.msra.mxu0 %v723
          %774 = vmatprep.subr.mxu0 0.0
          %775 = vmatpush1.msra.mxu0 %v724
          %776 = vmatprep.subr.mxu0 0.0
          %777 = vmatpush1.msra.mxu0 %v725
          %778 = vmatprep.subr.mxu0 0.0
          %779 = vmatpush1.msra.mxu0 %v726
          %780 = vmatprep.subr.mxu0 0.0
          %781 = vmatpush1.msra.mxu0 %v727
          %782 = vmatprep.subr.mxu0 0.0
          %783 = vmatpush1.msra.mxu0 %v728
          %784 = vmatprep.subr.mxu0 0.0
          %785 = vmatpush1.msra.mxu0 %v729
          %786 = vmatprep.subr.mxu0 0.0
          %787 = vmatpush1.msra.mxu0 %v730
          %788 = vmatprep.subr.mxu0 0.0
          %789 = vmatpush1.msra.mxu0 %v731
          %790 = vmatprep.subr.mxu0 0.0
          %791 = vmatpush1.msra.mxu0 %v732
          %792 = vmatprep.subr.mxu0 0.0
          %793 = vmatpush1.msra.mxu0 %v733
          %794 = vmatprep.subr.mxu0 0.0
          %795 = vmatpush1.msra.mxu0 %v734
          %796 = vmatprep.subr.mxu0 0.0
          %797 = vmatpush1.msra.mxu0 %v735
          %798 = vmatprep.subr.mxu0 0.0
          %799 = vmatpush1.msra.mxu0 %v736
          %800 = vmatprep.subr.mxu0 0.0
          %801 = vmatpush1.msra.mxu0 %v737
          %802 = vmatprep.subr.mxu0 0.0
          %803 = vmatpush1.msra.mxu0 %v738
          %804 = vmatprep.subr.mxu0 0.0
          %805 = vmatpush1.msra.mxu0 %v739
          %806 = vmatprep.subr.mxu0 0.0
          %807 = vmatpush1.msra.mxu0 %v740
          %808 = vmatprep.subr.mxu0 0.0
          %809 = vmatpush1.msra.mxu0 %v741
          %810 = vmatprep.subr.mxu0 0.0
          %811 = vmatpush1.msra.mxu0 %v742
          %812 = vmatprep.subr.mxu0 0.0
          %813 = vmatpush1.msra.mxu0 %v743
          %814 = vmatprep.subr.mxu0 0.0
          %815 = vmatpush1.msra.mxu0 %v744
          %816 = vmatprep.mubr.f32.mxu0 %v712
          %817 = vmatmul.mubr.f32.gmra.mrb[0].mxu0 %v711
          %v818 = vpop.f32.mrb[0].mxu0
          %v819 = vadd.f32 %v750, %v818
          %v820 = vpop.f32.mrb[0].mxu0
          %821 = vdwg.mxu0
          %822 = vst [vmem:[#allocation3] sm:$0x3] %v819
          %823 = vst [vmem:[#allocation11 + $0x2] sm:$0x3] %v501
        $region84: #{encoder_ve_t_forward.1} parent=67 // pred_fallthru
          _
        %v824 = vld [vmem:[#allocation2] sm:$0x3]
        %v825 = vld [vmem:[%s492] sm:$0xff]
        %v826 = vld [vmem:[%s492 + $0x8] sm:$0xff]
        %v827 = vld [vmem:[%s439] sm:$0xff]
        %v828 = vld [vmem:[%s439 + $0x8] sm:$0xff]
        %v829 = vld [vmem:[%s439 + $0x10] sm:$0xff]
        %v830 = vld [vmem:[%s439 + $0x18] sm:$0xff]
        %v831 = vld [vmem:[%s439 + $0x20] sm:$0xff]
        %v832 = vld [vmem:[%s439 + $0x28] sm:$0xff]
        %v833 = vld [vmem:[%s439 + $0x30] sm:$0xff]
        %v834 = vld [vmem:[%s439 + $0x38] sm:$0xff]
        %v835 = vld [vmem:[%s439 + $0x40] sm:$0xff]
        %v836 = vld [vmem:[%s439 + $0x48] sm:$0xff]
        %v837 = vld [vmem:[%s439 + $0x50] sm:$0xff]
        %v838 = vld [vmem:[%s439 + $0x58] sm:$0xff]
        %v839 = vld [vmem:[%s439 + $0x60] sm:$0xff]
        %v840 = vld [vmem:[%s439 + $0x68] sm:$0xff]
        %v841 = vld [vmem:[%s439 + $0x70] sm:$0xff]
        %v842 = vld [vmem:[%s439 + $0x78] sm:$0xff]
        %v843 = vld [vmem:[%s439 + $0x80] sm:$0xff]
        %v844 = vld [vmem:[%s439 + $0x88] sm:$0xff]
        %v845 = vld [vmem:[%s439 + $0x90] sm:$0xff]
        %v846 = vld [vmem:[%s439 + $0x98] sm:$0xff]
        %v847 = vld [vmem:[%s439 + $0xa0] sm:$0xff]
        %v848 = vld [vmem:[%s439 + $0xa8] sm:$0xff]
        %v849 = vld [vmem:[%s439 + $0xb0] sm:$0xff]
        %v850 = vld [vmem:[%s439 + $0xb8] sm:$0xff]
        %v851 = vld [vmem:[%s439 + $0xc0] sm:$0xff]
        %v852 = vld [vmem:[%s439 + $0xc8] sm:$0xff]
        %v853 = vld [vmem:[%s439 + $0xd0] sm:$0xff]
        %v854 = vld [vmem:[%s439 + $0xd8] sm:$0xff]
        %v855 = vld [vmem:[%s439 + $0xe0] sm:$0xff]
        %v856 = vld [vmem:[%s439 + $0xe8] sm:$0xff]
        %v857 = vld [vmem:[%s439 + $0xf0] sm:$0xff]
        %v858 = vld [vmem:[%s439 + $0xf8] sm:$0xff]
        %v859 = vld [vmem:[%s439 + $0x100] sm:$0xff]
        %v860 = vld [vmem:[%s439 + $0x108] sm:$0xff]
        %v861 = vld [vmem:[%s439 + $0x110] sm:$0xff]
        %v862 = vld [vmem:[%s439 + $0x118] sm:$0xff]
        %v863 = vld [vmem:[%s439 + $0x120] sm:$0xff]
        %v864 = vld [vmem:[%s439 + $0x128] sm:$0xff]
        %v865 = vld [vmem:[%s439 + $0x130] sm:$0xff]
        %v866 = vld [vmem:[%s439 + $0x138] sm:$0xff]
        %v867 = vld [vmem:[%s439 + $0x140] sm:$0xff]
        %v868 = vld [vmem:[%s439 + $0x148] sm:$0xff]
        %v869 = vld [vmem:[%s439 + $0x150] sm:$0xff]
        %v870 = vld [vmem:[%s439 + $0x158] sm:$0xff]
        %v871 = vld [vmem:[%s439 + $0x160] sm:$0xff]
        %v872 = vld [vmem:[%s439 + $0x168] sm:$0xff]
        %v873 = vld [vmem:[%s439 + $0x170] sm:$0xff]
        %v874 = vld [vmem:[%s439 + $0x178] sm:$0xff]
        %v875 = vld [vmem:[%s439 + $0x180] sm:$0xff]
        %v876 = vld [vmem:[%s439 + $0x188] sm:$0xff]
        %v877 = vld [vmem:[%s439 + $0x190] sm:$0xff]
        %v878 = vld [vmem:[%s439 + $0x198] sm:$0xff]
        %v879 = vld [vmem:[%s439 + $0x1a0] sm:$0xff]
        %v880 = vld [vmem:[%s439 + $0x1a8] sm:$0xff]
        %v881 = vld [vmem:[%s439 + $0x1b0] sm:$0xff]
        %v882 = vld [vmem:[%s439 + $0x1b8] sm:$0xff]
        %v883 = vld [vmem:[%s439 + $0x1c0] sm:$0xff]
        %v884 = vld [vmem:[%s439 + $0x1c8] sm:$0xff]
        %v885 = vld [vmem:[%s439 + $0x1d0] sm:$0xff]
        %v886 = vld [vmem:[%s439 + $0x1d8] sm:$0xff]
        %v887 = vld [vmem:[%s439 + $0x1e0] sm:$0xff]
        %v888 = vld [vmem:[%s439 + $0x1e8] sm:$0xff]
        %v889 = vld [vmem:[%s439 + $0x1f0] sm:$0xff]
        %v890 = vld [vmem:[%s439 + $0x1f8] sm:$0xff]
        %v891 = vunpack.c.l.s8.bf16 %v827
        %v892 = vunpack.c.h.s8.bf16 %v827
        %v893 = vunpack.c.l.s8.bf16 %v828
        %v894 = vunpack.c.h.s8.bf16 %v828
        %v895 = vunpack.c.l.s8.bf16 %v829
        %v896 = vunpack.c.h.s8.bf16 %v829
        %v897 = vunpack.c.l.s8.bf16 %v830
        %v898 = vunpack.c.h.s8.bf16 %v830
        %v899 = vunpack.c.l.s8.bf16 %v831
        %v900 = vunpack.c.h.s8.bf16 %v831
        %v901 = vunpack.c.l.s8.bf16 %v832
        %v902 = vunpack.c.h.s8.bf16 %v832
        %v903 = vunpack.c.l.s8.bf16 %v833
        %v904 = vunpack.c.h.s8.bf16 %v833
        %v905 = vunpack.c.l.s8.bf16 %v834
        %v906 = vunpack.c.h.s8.bf16 %v834
        %v907 = vunpack.c.l.s8.bf16 %v835
        %v908 = vunpack.c.h.s8.bf16 %v835
        %v909 = vunpack.c.l.s8.bf16 %v836
        %v910 = vunpack.c.h.s8.bf16 %v836
        %v911 = vunpack.c.l.s8.bf16 %v837
        %v912 = vunpack.c.h.s8.bf16 %v837
        %v913 = vunpack.c.l.s8.bf16 %v838
        %v914 = vunpack.c.h.s8.bf16 %v838
        %v915 = vunpack.c.l.s8.bf16 %v839
        %v916 = vunpack.c.h.s8.bf16 %v839
        %v917 = vunpack.c.l.s8.bf16 %v840
        %v918 = vunpack.c.h.s8.bf16 %v840
        %v919 = vunpack.c.l.s8.bf16 %v841
        %v920 = vunpack.c.h.s8.bf16 %v841
        %v921 = vunpack.c.l.s8.bf16 %v842
        %v922 = vunpack.c.h.s8.bf16 %v842
        %v923 = vunpack.c.l.s8.bf16 %v843
        %v924 = vunpack.c.h.s8.bf16 %v843
        %v925 = vunpack.c.l.s8.bf16 %v844
        %v926 = vunpack.c.h.s8.bf16 %v844
        %v927 = vunpack.c.l.s8.bf16 %v845
        %v928 = vunpack.c.h.s8.bf16 %v845
        %v929 = vunpack.c.l.s8.bf16 %v846
        %v930 = vunpack.c.h.s8.bf16 %v846
        %v931 = vunpack.c.l.s8.bf16 %v847
        %v932 = vunpack.c.h.s8.bf16 %v847
        %v933 = vunpack.c.l.s8.bf16 %v848
        %v934 = vunpack.c.h.s8.bf16 %v848
        %v935 = vunpack.c.l.s8.bf16 %v849
        %v936 = vunpack.c.h.s8.bf16 %v849
        %v937 = vunpack.c.l.s8.bf16 %v850
        %v938 = vunpack.c.h.s8.bf16 %v850
        %v939 = vunpack.c.l.s8.bf16 %v851
        %v940 = vunpack.c.h.s8.bf16 %v851
        %v941 = vunpack.c.l.s8.bf16 %v852
        %v942 = vunpack.c.h.s8.bf16 %v852
        %v943 = vunpack.c.l.s8.bf16 %v853
        %v944 = vunpack.c.h.s8.bf16 %v853
        %v945 = vunpack.c.l.s8.bf16 %v854
        %v946 = vunpack.c.h.s8.bf16 %v854
        %v947 = vunpack.c.l.s8.bf16 %v855
        %v948 = vunpack.c.h.s8.bf16 %v855
        %v949 = vunpack.c.l.s8.bf16 %v856
        %v950 = vunpack.c.h.s8.bf16 %v856
        %v951 = vunpack.c.l.s8.bf16 %v857
        %v952 = vunpack.c.h.s8.bf16 %v857
        %v953 = vunpack.c.l.s8.bf16 %v858
        %v954 = vunpack.c.h.s8.bf16 %v858
        %v955 = vunpack.c.l.s8.bf16 %v859
        %v956 = vunpack.c.h.s8.bf16 %v859
        %v957 = vunpack.c.l.s8.bf16 %v860
        %v958 = vunpack.c.h.s8.bf16 %v860
        %v959 = vunpack.c.l.s8.bf16 %v861
        %v960 = vunpack.c.h.s8.bf16 %v861
        %v961 = vunpack.c.l.s8.bf16 %v862
        %v962 = vunpack.c.h.s8.bf16 %v862
        %v963 = vunpack.c.l.s8.bf16 %v863
        %v964 = vunpack.c.h.s8.bf16 %v863
        %v965 = vunpack.c.l.s8.bf16 %v864
        %v966 = vunpack.c.h.s8.bf16 %v864
        %v967 = vunpack.c.l.s8.bf16 %v865
        %v968 = vunpack.c.h.s8.bf16 %v865
        %v969 = vunpack.c.l.s8.bf16 %v866
        %v970 = vunpack.c.h.s8.bf16 %v866
        %v971 = vunpack.c.l.s8.bf16 %v867
        %v972 = vunpack.c.h.s8.bf16 %v867
        %v973 = vunpack.c.l.s8.bf16 %v868
        %v974 = vunpack.c.h.s8.bf16 %v868
        %v975 = vunpack.c.l.s8.bf16 %v869
        %v976 = vunpack.c.h.s8.bf16 %v869
        %v977 = vunpack.c.l.s8.bf16 %v870
        %v978 = vunpack.c.h.s8.bf16 %v870
        %v979 = vunpack.c.l.s8.bf16 %v871
        %v980 = vunpack.c.h.s8.bf16 %v871
        %v981 = vunpack.c.l.s8.bf16 %v872
        %v982 = vunpack.c.h.s8.bf16 %v872
        %v983 = vunpack.c.l.s8.bf16 %v873
        %v984 = vunpack.c.h.s8.bf16 %v873
        %v985 = vunpack.c.l.s8.bf16 %v874
        %v986 = vunpack.c.h.s8.bf16 %v874
        %v987 = vunpack.c.l.s8.bf16 %v875
        %v988 = vunpack.c.h.s8.bf16 %v875
        %v989 = vunpack.c.l.s8.bf16 %v876
        %v990 = vunpack.c.h.s8.bf16 %v876
        %v991 = vunpack.c.l.s8.bf16 %v877
        %v992 = vunpack.c.h.s8.bf16 %v877
        %v993 = vunpack.c.l.s8.bf16 %v878
        %v994 = vunpack.c.h.s8.bf16 %v878
        %v995 = vunpack.c.l.s8.bf16 %v879
        %v996 = vunpack.c.h.s8.bf16 %v879
        %v997 = vunpack.c.l.s8.bf16 %v880
        %v998 = vunpack.c.h.s8.bf16 %v880
        %v999 = vunpack.c.l.s8.bf16 %v881
        %v1000 = vunpack.c.h.s8.bf16 %v881
        %v1001 = vunpack.c.l.s8.bf16 %v882
        %v1002 = vunpack.c.h.s8.bf16 %v882
        %v1003 = vunpack.c.l.s8.bf16 %v883
        %v1004 = vunpack.c.h.s8.bf16 %v883
        %v1005 = vunpack.c.l.s8.bf16 %v884
        %v1006 = vunpack.c.h.s8.bf16 %v884
        %v1007 = vunpack.c.l.s8.bf16 %v885
        %v1008 = vunpack.c.h.s8.bf16 %v885
        %v1009 = vunpack.c.l.s8.bf16 %v886
        %v1010 = vunpack.c.h.s8.bf16 %v886
        %v1011 = vunpack.c.l.s8.bf16 %v887
        %v1012 = vunpack.c.h.s8.bf16 %v887
        %v1013 = vunpack.c.l.s8.bf16 %v888
        %v1014 = vunpack.c.h.s8.bf16 %v888
        %v1015 = vunpack.c.l.s8.bf16 %v889
        %v1016 = vunpack.c.h.s8.bf16 %v889
        %v1017 = vunpack.c.l.s8.bf16 %v890
        %v1018 = vunpack.c.h.s8.bf16 %v890
        %v1021 = vcombine.high %v825, %v825
        %v1023 = vunpack.c.l.s4 1966171168
        %v1024 = vunpack.c.0.s8 %v1023
        %v1025 = vlaneseq
        %v1026 = vshrl.u32 %v1025, 7
        %v1027 = vsub.s32 %v1024, %v1026
        %v1028 = vrot.slane %v825, %v1027
        %v1030 = vunpack.c.l.s4 1966171168
        %v1031 = vunpack.c.0.s8 %v1030
        %v1032 = vlaneseq
        %v1033 = vshrl.u32 %v1032, 7
        %v1034 = vsub.s32 %v1031, %v1033
        %v1035 = vrot.slane %v1021, %v1034
        %v1036 = vcombine.high %v1028, %v1028
        %v1037 = vcombine.high %v1035, %v1035
        %v1039 = vunpack.c.l.s4 1966171168
        %v1040 = vunpack.c.0.s8 %v1039
        %v1041 = vlaneseq
        %v1042 = vshrl.u32 %v1041, 7
        %v1043 = vsub.s32 %v1040, %v1042
        %v1044 = vrot.slane %v1028, %v1043
        %v1046 = vunpack.c.l.s4 1966171168
        %v1047 = vunpack.c.0.s8 %v1046
        %v1048 = vlaneseq
        %v1049 = vshrl.u32 %v1048, 7
        %v1050 = vsub.s32 %v1047, %v1049
        %v1051 = vrot.slane %v1035, %v1050
        %v1053 = vunpack.c.l.s4 1966171168
        %v1054 = vunpack.c.0.s8 %v1053
        %v1055 = vlaneseq
        %v1056 = vshrl.u32 %v1055, 7
        %v1057 = vsub.s32 %v1054, %v1056
        %v1058 = vrot.slane %v1036, %v1057
        %v1060 = vunpack.c.l.s4 1966171168
        %v1061 = vunpack.c.0.s8 %v1060
        %v1062 = vlaneseq
        %v1063 = vshrl.u32 %v1062, 7
        %v1064 = vsub.s32 %v1061, %v1063
        %v1065 = vrot.slane %v1037, %v1064
        %v1066 = vcombine.high %v1044, %v1044
        %v1067 = vcombine.high %v1051, %v1051
        %v1068 = vcombine.high %v1058, %v1058
        %v1069 = vcombine.high %v1065, %v1065
        %v1070 = vcombine.high %v826, %v826
        %v1072 = vunpack.c.l.s4 1966171168
        %v1073 = vunpack.c.0.s8 %v1072
        %v1074 = vlaneseq
        %v1075 = vshrl.u32 %v1074, 7
        %v1076 = vsub.s32 %v1073, %v1075
        %v1077 = vrot.slane %v826, %v1076
        %v1079 = vunpack.c.l.s4 1966171168
        %v1080 = vunpack.c.0.s8 %v1079
        %v1081 = vlaneseq
        %v1082 = vshrl.u32 %v1081, 7
        %v1083 = vsub.s32 %v1080, %v1082
        %v1084 = vrot.slane %v1070, %v1083
        %v1085 = vcombine.high %v1077, %v1077
        %v1086 = vcombine.high %v1084, %v1084
        %v1088 = vunpack.c.l.s4 1966171168
        %v1089 = vunpack.c.0.s8 %v1088
        %v1090 = vlaneseq
        %v1091 = vshrl.u32 %v1090, 7
        %v1092 = vsub.s32 %v1089, %v1091
        %v1093 = vrot.slane %v1077, %v1092
        %v1095 = vunpack.c.l.s4 1966171168
        %v1096 = vunpack.c.0.s8 %v1095
        %v1097 = vlaneseq
        %v1098 = vshrl.u32 %v1097, 7
        %v1099 = vsub.s32 %v1096, %v1098
        %v1100 = vrot.slane %v1084, %v1099
        %v1102 = vunpack.c.l.s4 1966171168
        %v1103 = vunpack.c.0.s8 %v1102
        %v1104 = vlaneseq
        %v1105 = vshrl.u32 %v1104, 7
        %v1106 = vsub.s32 %v1103, %v1105
        %v1107 = vrot.slane %v1085, %v1106
        %v1109 = vunpack.c.l.s4 1966171168
        %v1110 = vunpack.c.0.s8 %v1109
        %v1111 = vlaneseq
        %v1112 = vshrl.u32 %v1111, 7
        %v1113 = vsub.s32 %v1110, %v1112
        %v1114 = vrot.slane %v1086, %v1113
        %v1115 = vcombine.high %v1093, %v1093
        %v1116 = vcombine.high %v1100, %v1100
        %v1117 = vcombine.high %v1107, %v1107
        %v1118 = vcombine.high %v1114, %v1114
        %1135 = vmatprep.subr.bf16.mxu0 0
        %1136 = vmatpush1.bf16.msra.mxu0 %v891
        %1137 = vmatprep.subr.bf16.mxu0 0
        %1138 = vmatpush1.bf16.msra.mxu0 %v892
        %1139 = vmatprep.subr.bf16.mxu0 0
        %1140 = vmatpush1.bf16.msra.mxu0 %v893
        %1141 = vmatprep.subr.bf16.mxu0 0
        %1142 = vmatpush1.bf16.msra.mxu0 %v894
        %1143 = vmatprep.subr.bf16.mxu0 0
        %1144 = vmatpush1.bf16.msra.mxu0 %v895
        %1145 = vmatprep.subr.bf16.mxu0 0
        %1146 = vmatpush1.bf16.msra.mxu0 %v896
        %1147 = vmatprep.subr.bf16.mxu0 0
        %1148 = vmatpush1.bf16.msra.mxu0 %v897
        %1149 = vmatprep.subr.bf16.mxu0 0
        %1150 = vmatpush1.bf16.msra.mxu0 %v898
        %1151 = vmatprep.subr.bf16.mxu0 0
        %1152 = vmatpush1.bf16.msra.mxu0 %v899
        %1153 = vmatprep.subr.bf16.mxu0 0
        %1154 = vmatpush1.bf16.msra.mxu0 %v900
        %1155 = vmatprep.subr.bf16.mxu0 0
        %1156 = vmatpush1.bf16.msra.mxu0 %v901
        %1157 = vmatprep.subr.bf16.mxu0 0
        %1158 = vmatpush1.bf16.msra.mxu0 %v902
        %1159 = vmatprep.subr.bf16.mxu0 0
        %1160 = vmatpush1.bf16.msra.mxu0 %v903
        %1161 = vmatprep.subr.bf16.mxu0 0
        %1162 = vmatpush1.bf16.msra.mxu0 %v904
        %1163 = vmatprep.subr.bf16.mxu0 0
        %1164 = vmatpush1.bf16.msra.mxu0 %v905
        %1165 = vmatprep.subr.bf16.mxu0 0
        %1166 = vmatpush1.bf16.msra.mxu0 %v906
        %1167 = vmatprep.mubr.bf16.mxu0 %v1058
        %1168 = vmatmul.mubr.bf16.gmra.mrb[0].mxu0 %v1044
        %v1169 = vpop.f32.mrb[0].mxu0
        %v1170 = vadd.f32 0.0, %v1169
        %v1171 = vpop.f32.mrb[0].mxu0
        %v1172 = vpop.f32.mrb[0].mxu0
        %v1173 = vpop.f32.mrb[0].mxu0
        %1174 = vdwg.mxu0
        %1175 = vmatprep.subr.bf16.mxu0 0
        %1176 = vmatpush1.bf16.msra.mxu0 %v907
        %1177 = vmatprep.subr.bf16.mxu0 0
        %1178 = vmatpush1.bf16.msra.mxu0 %v908
        %1179 = vmatprep.subr.bf16.mxu0 0
        %1180 = vmatpush1.bf16.msra.mxu0 %v909
        %1181 = vmatprep.subr.bf16.mxu0 0
        %1182 = vmatpush1.bf16.msra.mxu0 %v910
        %1183 = vmatprep.subr.bf16.mxu0 0
        %1184 = vmatpush1.bf16.msra.mxu0 %v911
        %1185 = vmatprep.subr.bf16.mxu0 0
        %1186 = vmatpush1.bf16.msra.mxu0 %v912
        %1187 = vmatprep.subr.bf16.mxu0 0
        %1188 = vmatpush1.bf16.msra.mxu0 %v913
        %1189 = vmatprep.subr.bf16.mxu0 0
        %1190 = vmatpush1.bf16.msra.mxu0 %v914
        %1191 = vmatprep.subr.bf16.mxu0 0
        %1192 = vmatpush1.bf16.msra.mxu0 %v915
        %1193 = vmatprep.subr.bf16.mxu0 0
        %1194 = vmatpush1.bf16.msra.mxu0 %v916
        %1195 = vmatprep.subr.bf16.mxu0 0
        %1196 = vmatpush1.bf16.msra.mxu0 %v917
        %1197 = vmatprep.subr.bf16.mxu0 0
        %1198 = vmatpush1.bf16.msra.mxu0 %v918
        %1199 = vmatprep.subr.bf16.mxu0 0
        %1200 = vmatpush1.bf16.msra.mxu0 %v919
        %1201 = vmatprep.subr.bf16.mxu0 0
        %1202 = vmatpush1.bf16.msra.mxu0 %v920
        %1203 = vmatprep.subr.bf16.mxu0 0
        %1204 = vmatpush1.bf16.msra.mxu0 %v921
        %1205 = vmatprep.subr.bf16.mxu0 0
        %1206 = vmatpush1.bf16.msra.mxu0 %v922
        %1207 = vmatprep.mubr.bf16.mxu0 %v1068
        %1208 = vmatmul.mubr.bf16.gmra.mrb[0].mxu0 %v1066
        %v1209 = vpop.f32.mrb[0].mxu0
        %v1210 = vadd.f32 %v1170, %v1209
        %v1211 = vpop.f32.mrb[0].mxu0
        %v1212 = vpop.f32.mrb[0].mxu0
        %v1213 = vpop.f32.mrb[0].mxu0
        %1214 = vdwg.mxu0
        %1215 = vmatprep.subr.bf16.mxu0 0
        %1216 = vmatpush1.bf16.msra.mxu0 %v923
        %1217 = vmatprep.subr.bf16.mxu0 0
        %1218 = vmatpush1.bf16.msra.mxu0 %v924
        %1219 = vmatprep.subr.bf16.mxu0 0
        %1220 = vmatpush1.bf16.msra.mxu0 %v925
        %1221 = vmatprep.subr.bf16.mxu0 0
        %1222 = vmatpush1.bf16.msra.mxu0 %v926
        %1223 = vmatprep.subr.bf16.mxu0 0
        %1224 = vmatpush1.bf16.msra.mxu0 %v927
        %1225 = vmatprep.subr.bf16.mxu0 0
        %1226 = vmatpush1.bf16.msra.mxu0 %v928
        %1227 = vmatprep.subr.bf16.mxu0 0
        %1228 = vmatpush1.bf16.msra.mxu0 %v929
        %1229 = vmatprep.subr.bf16.mxu0 0
        %1230 = vmatpush1.bf16.msra.mxu0 %v930
        %1231 = vmatprep.subr.bf16.mxu0 0
        %1232 = vmatpush1.bf16.msra.mxu0 %v931
        %1233 = vmatprep.subr.bf16.mxu0 0
        %1234 = vmatpush1.bf16.msra.mxu0 %v932
        %1235 = vmatprep.subr.bf16.mxu0 0
        %1236 = vmatpush1.bf16.msra.mxu0 %v933
        %1237 = vmatprep.subr.bf16.mxu0 0
        %1238 = vmatpush1.bf16.msra.mxu0 %v934
        %1239 = vmatprep.subr.bf16.mxu0 0
        %1240 = vmatpush1.bf16.msra.mxu0 %v935
        %1241 = vmatprep.subr.bf16.mxu0 0
        %1242 = vmatpush1.bf16.msra.mxu0 %v936
        %1243 = vmatprep.subr.bf16.mxu0 0
        %1244 = vmatpush1.bf16.msra.mxu0 %v937
        %1245 = vmatprep.subr.bf16.mxu0 0
        %1246 = vmatpush1.bf16.msra.mxu0 %v938
        %1247 = vmatprep.mubr.bf16.mxu0 %v1065
        %1248 = vmatmul.mubr.bf16.gmra.mrb[0].mxu0 %v1051
        %v1249 = vpop.f32.mrb[0].mxu0
        %v1250 = vadd.f32 %v1210, %v1249
        %v1251 = vpop.f32.mrb[0].mxu0
        %v1252 = vpop.f32.mrb[0].mxu0
        %v1253 = vpop.f32.mrb[0].mxu0
        %1254 = vdwg.mxu0
        %1255 = vmatprep.subr.bf16.mxu0 0
        %1256 = vmatpush1.bf16.msra.mxu0 %v939
        %1257 = vmatprep.subr.bf16.mxu0 0
        %1258 = vmatpush1.bf16.msra.mxu0 %v940
        %1259 = vmatprep.subr.bf16.mxu0 0
        %1260 = vmatpush1.bf16.msra.mxu0 %v941
        %1261 = vmatprep.subr.bf16.mxu0 0
        %1262 = vmatpush1.bf16.msra.mxu0 %v942
        %1263 = vmatprep.subr.bf16.mxu0 0
        %1264 = vmatpush1.bf16.msra.mxu0 %v943
        %1265 = vmatprep.subr.bf16.mxu0 0
        %1266 = vmatpush1.bf16.msra.mxu0 %v944
        %1267 = vmatprep.subr.bf16.mxu0 0
        %1268 = vmatpush1.bf16.msra.mxu0 %v945
        %1269 = vmatprep.subr.bf16.mxu0 0
        %1270 = vmatpush1.bf16.msra.mxu0 %v946
        %1271 = vmatprep.subr.bf16.mxu0 0
        %1272 = vmatpush1.bf16.msra.mxu0 %v947
        %1273 = vmatprep.subr.bf16.mxu0 0
        %1274 = vmatpush1.bf16.msra.mxu0 %v948
        %1275 = vmatprep.subr.bf16.mxu0 0
        %1276 = vmatpush1.bf16.msra.mxu0 %v949
        %1277 = vmatprep.subr.bf16.mxu0 0
        %1278 = vmatpush1.bf16.msra.mxu0 %v950
        %1279 = vmatprep.subr.bf16.mxu0 0
        %1280 = vmatpush1.bf16.msra.mxu0 %v951
        %1281 = vmatprep.subr.bf16.mxu0 0
        %1282 = vmatpush1.bf16.msra.mxu0 %v952
        %1283 = vmatprep.subr.bf16.mxu0 0
        %1284 = vmatpush1.bf16.msra.mxu0 %v953
        %1285 = vmatprep.subr.bf16.mxu0 0
        %1286 = vmatpush1.bf16.msra.mxu0 %v954
        %1287 = vmatprep.mubr.bf16.mxu0 %v1069
        %1288 = vmatmul.mubr.bf16.gmra.mrb[0].mxu0 %v1067
        %v1289 = vpop.f32.mrb[0].mxu0
        %v1290 = vadd.f32 %v1250, %v1289
        %v1291 = vpop.f32.mrb[0].mxu0
        %v1292 = vpop.f32.mrb[0].mxu0
        %v1293 = vpop.f32.mrb[0].mxu0
        %1294 = vdwg.mxu0
        %1295 = vmatprep.subr.bf16.mxu0 0
        %1296 = vmatpush1.bf16.msra.mxu0 %v955
        %1297 = vmatprep.subr.bf16.mxu0 0
        %1298 = vmatpush1.bf16.msra.mxu0 %v956
        %1299 = vmatprep.subr.bf16.mxu0 0
        %1300 = vmatpush1.bf16.msra.mxu0 %v957
        %1301 = vmatprep.subr.bf16.mxu0 0
        %1302 = vmatpush1.bf16.msra.mxu0 %v958
        %1303 = vmatprep.subr.bf16.mxu0 0
        %1304 = vmatpush1.bf16.msra.mxu0 %v959
        %1305 = vmatprep.subr.bf16.mxu0 0
        %1306 = vmatpush1.bf16.msra.mxu0 %v960
        %1307 = vmatprep.subr.bf16.mxu0 0
        %1308 = vmatpush1.bf16.msra.mxu0 %v961
        %1309 = vmatprep.subr.bf16.mxu0 0
        %1310 = vmatpush1.bf16.msra.mxu0 %v962
        %1311 = vmatprep.subr.bf16.mxu0 0
        %1312 = vmatpush1.bf16.msra.mxu0 %v963
        %1313 = vmatprep.subr.bf16.mxu0 0
        %1314 = vmatpush1.bf16.msra.mxu0 %v964
        %1315 = vmatprep.subr.bf16.mxu0 0
        %1316 = vmatpush1.bf16.msra.mxu0 %v965
        %1317 = vmatprep.subr.bf16.mxu0 0
        %1318 = vmatpush1.bf16.msra.mxu0 %v966
        %1319 = vmatprep.subr.bf16.mxu0 0
        %1320 = vmatpush1.bf16.msra.mxu0 %v967
        %1321 = vmatprep.subr.bf16.mxu0 0
        %1322 = vmatpush1.bf16.msra.mxu0 %v968
        %1323 = vmatprep.subr.bf16.mxu0 0
        %1324 = vmatpush1.bf16.msra.mxu0 %v969
        %1325 = vmatprep.subr.bf16.mxu0 0
        %1326 = vmatpush1.bf16.msra.mxu0 %v970
        %1327 = vmatprep.mubr.bf16.mxu0 %v1107
        %1328 = vmatmul.mubr.bf16.gmra.mrb[0].mxu0 %v1093
        %v1329 = vpop.f32.mrb[0].mxu0
        %v1330 = vadd.f32 %v1290, %v1329
        %v1331 = vpop.f32.mrb[0].mxu0
        %v1332 = vpop.f32.mrb[0].mxu0
        %v1333 = vpop.f32.mrb[0].mxu0
        %1334 = vdwg.mxu0
        %1335 = vmatprep.subr.bf16.mxu0 0
        %1336 = vmatpush1.bf16.msra.mxu0 %v971
        %1337 = vmatprep.subr.bf16.mxu0 0
        %1338 = vmatpush1.bf16.msra.mxu0 %v972
        %1339 = vmatprep.subr.bf16.mxu0 0
        %1340 = vmatpush1.bf16.msra.mxu0 %v973
        %1341 = vmatprep.subr.bf16.mxu0 0
        %1342 = vmatpush1.bf16.msra.mxu0 %v974
        %1343 = vmatprep.subr.bf16.mxu0 0
        %1344 = vmatpush1.bf16.msra.mxu0 %v975
        %1345 = vmatprep.subr.bf16.mxu0 0
        %1346 = vmatpush1.bf16.msra.mxu0 %v976
        %1347 = vmatprep.subr.bf16.mxu0 0
        %1348 = vmatpush1.bf16.msra.mxu0 %v977
        %1349 = vmatprep.subr.bf16.mxu0 0
        %1350 = vmatpush1.bf16.msra.mxu0 %v978
        %1351 = vmatprep.subr.bf16.mxu0 0
        %1352 = vmatpush1.bf16.msra.mxu0 %v979
        %1353 = vmatprep.subr.bf16.mxu0 0
        %1354 = vmatpush1.bf16.msra.mxu0 %v980
        %1355 = vmatprep.subr.bf16.mxu0 0
        %1356 = vmatpush1.bf16.msra.mxu0 %v981
        %1357 = vmatprep.subr.bf16.mxu0 0
        %1358 = vmatpush1.bf16.msra.mxu0 %v982
        %1359 = vmatprep.subr.bf16.mxu0 0
        %1360 = vmatpush1.bf16.msra.mxu0 %v983
        %1361 = vmatprep.subr.bf16.mxu0 0
        %1362 = vmatpush1.bf16.msra.mxu0 %v984
        %1363 = vmatprep.subr.bf16.mxu0 0
        %1364 = vmatpush1.bf16.msra.mxu0 %v985
        %1365 = vmatprep.subr.bf16.mxu0 0
        %1366 = vmatpush1.bf16.msra.mxu0 %v986
        %1367 = vmatprep.mubr.bf16.mxu0 %v1117
        %1368 = vmatmul.mubr.bf16.gmra.mrb[0].mxu0 %v1115
        %v1369 = vpop.f32.mrb[0].mxu0
        %v1370 = vadd.f32 %v1330, %v1369
        %v1371 = vpop.f32.mrb[0].mxu0
        %v1372 = vpop.f32.mrb[0].mxu0
        %v1373 = vpop.f32.mrb[0].mxu0
        %1374 = vdwg.mxu0
        %1375 = vmatprep.subr.bf16.mxu0 0
        %1376 = vmatpush1.bf16.msra.mxu0 %v987
        %1377 = vmatprep.subr.bf16.mxu0 0
        %1378 = vmatpush1.bf16.msra.mxu0 %v988
        %1379 = vmatprep.subr.bf16.mxu0 0
        %1380 = vmatpush1.bf16.msra.mxu0 %v989
        %1381 = vmatprep.subr.bf16.mxu0 0
        %1382 = vmatpush1.bf16.msra.mxu0 %v990
        %1383 = vmatprep.subr.bf16.mxu0 0
        %1384 = vmatpush1.bf16.msra.mxu0 %v991
        %1385 = vmatprep.subr.bf16.mxu0 0
        %1386 = vmatpush1.bf16.msra.mxu0 %v992
        %1387 = vmatprep.subr.bf16.mxu0 0
        %1388 = vmatpush1.bf16.msra.mxu0 %v993
        %1389 = vmatprep.subr.bf16.mxu0 0
        %1390 = vmatpush1.bf16.msra.mxu0 %v994
        %1391 = vmatprep.subr.bf16.mxu0 0
        %1392 = vmatpush1.bf16.msra.mxu0 %v995
        %1393 = vmatprep.subr.bf16.mxu0 0
        %1394 = vmatpush1.bf16.msra.mxu0 %v996
        %1395 = vmatprep.subr.bf16.mxu0 0
        %1396 = vmatpush1.bf16.msra.mxu0 %v997
        %1397 = vmatprep.subr.bf16.mxu0 0
        %1398 = vmatpush1.bf16.msra.mxu0 %v998
        %1399 = vmatprep.subr.bf16.mxu0 0
        %1400 = vmatpush1.bf16.msra.mxu0 %v999
        %1401 = vmatprep.subr.bf16.mxu0 0
        %1402 = vmatpush1.bf16.msra.mxu0 %v1000
        %1403 = vmatprep.subr.bf16.mxu0 0
        %1404 = vmatpush1.bf16.msra.mxu0 %v1001
        %1405 = vmatprep.subr.bf16.mxu0 0
        %1406 = vmatpush1.bf16.msra.mxu0 %v1002
        %1407 = vmatprep.mubr.bf16.mxu0 %v1114
        %1408 = vmatmul.mubr.bf16.gmra.mrb[0].mxu0 %v1100
        %v1409 = vpop.f32.mrb[0].mxu0
        %v1410 = vadd.f32 %v1370, %v1409
        %v1411 = vpop.f32.mrb[0].mxu0
        %v1412 = vpop.f32.mrb[0].mxu0
        %v1413 = vpop.f32.mrb[0].mxu0
        %1414 = vdwg.mxu0
        %1415 = vmatprep.subr.bf16.mxu0 0
        %1416 = vmatpush1.bf16.msra.mxu0 %v1003
        %1417 = vmatprep.subr.bf16.mxu0 0
        %1418 = vmatpush1.bf16.msra.mxu0 %v1004
        %1419 = vmatprep.subr.bf16.mxu0 0
        %1420 = vmatpush1.bf16.msra.mxu0 %v1005
        %1421 = vmatprep.subr.bf16.mxu0 0
        %1422 = vmatpush1.bf16.msra.mxu0 %v1006
        %1423 = vmatprep.subr.bf16.mxu0 0
        %1424 = vmatpush1.bf16.msra.mxu0 %v1007
        %1425 = vmatprep.subr.bf16.mxu0 0
        %1426 = vmatpush1.bf16.msra.mxu0 %v1008
        %1427 = vmatprep.subr.bf16.mxu0 0
        %1428 = vmatpush1.bf16.msra.mxu0 %v1009
        %1429 = vmatprep.subr.bf16.mxu0 0
        %1430 = vmatpush1.bf16.msra.mxu0 %v1010
        %1431 = vmatprep.subr.bf16.mxu0 0
        %1432 = vmatpush1.bf16.msra.mxu0 %v1011
        %1433 = vmatprep.subr.bf16.mxu0 0
        %1434 = vmatpush1.bf16.msra.mxu0 %v1012
        %1435 = vmatprep.subr.bf16.mxu0 0
        %1436 = vmatpush1.bf16.msra.mxu0 %v1013
        %1437 = vmatprep.subr.bf16.mxu0 0
        %1438 = vmatpush1.bf16.msra.mxu0 %v1014
        %1439 = vmatprep.subr.bf16.mxu0 0
        %1440 = vmatpush1.bf16.msra.mxu0 %v1015
        %1441 = vmatprep.subr.bf16.mxu0 0
        %1442 = vmatpush1.bf16.msra.mxu0 %v1016
        %1443 = vmatprep.subr.bf16.mxu0 0
        %1444 = vmatpush1.bf16.msra.mxu0 %v1017
        %1445 = vmatprep.subr.bf16.mxu0 0
        %1446 = vmatpush1.bf16.msra.mxu0 %v1018
        %1447 = vmatprep.mubr.bf16.mxu0 %v1118
        %1448 = vmatmul.mubr.bf16.gmra.mrb[0].mxu0 %v1116
        %v1449 = vpop.f32.mrb[0].mxu0
        %v1450 = vadd.f32 %v1410, %v1449
        %v1451 = vpop.f32.mrb[0].mxu0
        %v1452 = vpop.f32.mrb[0].mxu0
        %v1453 = vpop.f32.mrb[0].mxu0
        %1454 = vdwg.mxu0
        %v1455 = vadd.f32 %v824, %v1450
        %1456 = vst [vmem:[#allocation2] sm:$0x3] %v1455
        %p1457 = scmp.eq.s32.totalorder %s31, 1
        // Predicated region
        $region85: #{encoder_ve_t_forward.1} parent=67 // pred_check
          %p1458 = pneg %p1457
        $region86: #{encoder_ve_t_forward.1} parent=67 // pred_check_branch
          %1460 = sbr.rel (%p1458) target = $region88
        $region87: #{encoder_ve_t_forward.1} parent=67 // pred_region
          %v1461 = vld [vmem:[#allocation2] sm:$0x3]
          %v1462 = vld [vmem:[%s2] sm:$0x1]
          %v1464 = vlaneseq
          %v1465 = vshrl.u32 %v1464, 7
          %v1466 = vsub.s32 0, %v1465
          %v1467 = vrot.slane %v1462, %v1466
          %v1469 = vmul.f32 %v1461, %v1467
          %v1470 = vld [vmem:[%s3] sm:$0x1]
          %v1472 = vlaneseq
          %v1473 = vshrl.u32 %v1472, 7
          %v1474 = vsub.s32 0, %v1473
          %v1475 = vrot.slane %v1470, %v1474
          %v1477 = vadd.f32 %v1469, %v1475
          %1478 = vst [vmem:[#allocation11] sm:$0x3] %v1477
          %v1479 = vld [vmem:[#allocation3] sm:$0x3]
          %v1480 = vld [vmem:[%s4] sm:$0xff]
          %v1481 = vld [vmem:[%s4 + $0x8] sm:$0xff]
          %v1482 = vld [vmem:[%s4 + $0x10] sm:$0xff]
          %v1483 = vld [vmem:[%s4 + $0x18] sm:$0xff]
          %v1484 = vld [vmem:[%s4 + $0x20] sm:$0xff]
          %v1485 = vld [vmem:[%s4 + $0x28] sm:$0xff]
          %v1486 = vld [vmem:[%s4 + $0x30] sm:$0xff]
          %v1487 = vld [vmem:[%s4 + $0x38] sm:$0xff]
          %v1488 = vld [vmem:[%s4 + $0x40] sm:$0xff]
          %v1489 = vld [vmem:[%s4 + $0x48] sm:$0xff]
          %v1490 = vld [vmem:[%s4 + $0x50] sm:$0xff]
          %v1491 = vld [vmem:[%s4 + $0x58] sm:$0xff]
          %v1492 = vld [vmem:[%s4 + $0x60] sm:$0xff]
          %v1493 = vld [vmem:[%s4 + $0x68] sm:$0xff]
          %v1494 = vld [vmem:[%s4 + $0x70] sm:$0xff]
          %v1495 = vld [vmem:[%s4 + $0x78] sm:$0xff]
          %1496 = vmatprep.subr.mxu0 0.0
          %1497 = vmatpush1.msra.mxu0 %v1480
          %1498 = vmatprep.subr.mxu0 0.0
          %1499 = vmatpush1.msra.mxu0 %v1481
          %1500 = vmatprep.subr.mxu0 0.0
          %1501 = vmatpush1.msra.mxu0 %v1482
          %1502 = vmatprep.subr.mxu0 0.0
          %1503 = vmatpush1.msra.mxu0 %v1483
          %1504 = vmatprep.subr.mxu0 0.0
          %1505 = vmatpush1.msra.mxu0 %v1484
          %1506 = vmatprep.subr.mxu0 0.0
          %1507 = vmatpush1.msra.mxu0 %v1485
          %1508 = vmatprep.subr.mxu0 0.0
          %1509 = vmatpush1.msra.mxu0 %v1486
          %1510 = vmatprep.subr.mxu0 0.0
          %1511 = vmatpush1.msra.mxu0 %v1487
          %1512 = vmatprep.subr.mxu0 0.0
          %1513 = vmatpush1.msra.mxu0 %v1488
          %1514 = vmatprep.subr.mxu0 0.0
          %1515 = vmatpush1.msra.mxu0 %v1489
          %1516 = vmatprep.subr.mxu0 0.0
          %1517 = vmatpush1.msra.mxu0 %v1490
          %1518 = vmatprep.subr.mxu0 0.0
          %1519 = vmatpush1.msra.mxu0 %v1491
          %1520 = vmatprep.subr.mxu0 0.0
          %1521 = vmatpush1.msra.mxu0 %v1492
          %1522 = vmatprep.subr.mxu0 0.0
          %1523 = vmatpush1.msra.mxu0 %v1493
          %1524 = vmatprep.subr.mxu0 0.0
          %1525 = vmatpush1.msra.mxu0 %v1494
          %1526 = vmatprep.subr.mxu0 0.0
          %1527 = vmatpush1.msra.mxu0 %v1495
          %1528 = vmatprep.subr.mxu0 0.0
          %1529 = vmatpush1.msra.mxu0 0.0
          %1530 = vmatprep.subr.mxu0 0.0
          %1531 = vmatpush1.msra.mxu0 0.0
          %1532 = vmatprep.subr.mxu0 0.0
          %1533 = vmatpush1.msra.mxu0 0.0
          %1534 = vmatprep.subr.mxu0 0.0
          %1535 = vmatpush1.msra.mxu0 0.0
          %1536 = vmatprep.subr.mxu0 0.0
          %1537 = vmatpush1.msra.mxu0 0.0
          %1538 = vmatprep.subr.mxu0 0.0
          %1539 = vmatpush1.msra.mxu0 0.0
          %1540 = vmatprep.subr.mxu0 0.0
          %1541 = vmatpush1.msra.mxu0 0.0
          %1542 = vmatprep.subr.mxu0 0.0
          %1543 = vmatpush1.msra.mxu0 0.0
          %1544 = vmatprep.subr.mxu0 0.0
          %1545 = vmatpush1.msra.mxu0 0.0
          %1546 = vmatprep.subr.mxu0 0.0
          %1547 = vmatpush1.msra.mxu0 0.0
          %1548 = vmatprep.subr.mxu0 0.0
          %1549 = vmatpush1.msra.mxu0 0.0
          %1550 = vmatprep.subr.mxu0 0.0
          %1551 = vmatpush1.msra.mxu0 0.0
          %1552 = vmatprep.subr.mxu0 0.0
          %1553 = vmatpush1.msra.mxu0 0.0
          %1554 = vmatprep.subr.mxu0 0.0
          %1555 = vmatpush1.msra.mxu0 0.0
          %1556 = vmatprep.subr.mxu0 0.0
          %1557 = vmatpush1.msra.mxu0 0.0
          %1558 = vmatprep.subr.mxu0 0.0
          %1559 = vmatpush1.msra.mxu0 0.0
          %1560 = vmatprep.mubr.f32.mxu0 0.0
          %1561 = vmatmul.mubr.f32.gmra.mrb[0].mxu0 %v1477
          %v1562 = vpop.f32.mrb[0].mxu0
          %v1563 = vadd.f32 0.0, %v1562
          %v1564 = vpop.f32.mrb[0].mxu0
          %1565 = vdwg.mxu0
          %v1566 = vadd.f32 %v1479, %v1563
          %1567 = vst [vmem:[#allocation10] sm:$0x3] %v1566
        $region88: #{encoder_ve_t_forward.1} parent=67 // pred_fallthru
          _
        // Predicated region
        $region89: #{encoder_ve_t_forward.1} parent=67 // pred_check
          %p1568 = pneg %p306
        $region90: #{encoder_ve_t_forward.1} parent=67 // pred_check_branch
          %1570 = sbr.rel (%p1568) target = $region92
        $region91: #{encoder_ve_t_forward.1} parent=67 // pred_region
          %s1572 = ssub.s32 32, 32
          %1573 = vsyncadd [#allocation6], %s1572
          %s1575 = sshll.u32 [#allocation10], 4
          %s1576 = int_to_ptr.vmem [resolvable:$true] %s1575
          %1578 = dma.vmem_to_hbm [thread:$0]  %s1576, 32, %s12, [#allocation6]
        $region92: #{encoder_ve_t_forward.1} parent=67 // pred_fallthru
          _
        // Predicated region
        $region93: #{encoder_ve_t_forward.1} parent=67 // pred_check
          %p1579 = pneg %p327
        $region94: #{encoder_ve_t_forward.1} parent=67 // pred_check_branch
          %1581 = sbr.rel (%p1579) target = $region96
        $region95: #{encoder_ve_t_forward.1} parent=67 // pred_region
          %s1583 = ssub.s32 64, 64
          %1584 = vsyncadd [#allocation12], %s1583
          %s1586 = sshll.u32 [#allocation11], 4
          %s1587 = int_to_ptr.vmem [resolvable:$true] %s1586
          %1589 = dma.vmem_to_hbm [thread:$0]  %s1587, 64, %s13, [#allocation12]
        $region96: #{encoder_ve_t_forward.1} parent=67 // pred_fallthru
          _
        // Predicated region
        $region97: #{encoder_ve_t_forward.1} parent=67 // pred_check
          %p1590 = pneg %p306
        $region98: #{encoder_ve_t_forward.1} parent=67 // pred_check_branch
          %1592 = sbr.rel (%p1590) target = $region100
        $region99: #{encoder_ve_t_forward.1} parent=67 // pred_region
          %1593 = dma.done [#allocation6], 32
        $region100: #{encoder_ve_t_forward.1} parent=67 // pred_fallthru
          _
        // Predicated region
        $region101: #{encoder_ve_t_forward.1} parent=67 // pred_check
          %p1594 = pneg %p327
        $region102: #{encoder_ve_t_forward.1} parent=67 // pred_check_branch
          %1596 = sbr.rel (%p1594) target = $region104
        $region103: #{encoder_ve_t_forward.1} parent=67 // pred_region
          %1597 = dma.done [#allocation12], 64
        $region104: #{encoder_ve_t_forward.1} parent=67 // pred_fallthru
          _
      $region68: #{encoder_ve_t_forward.1} parent=5 // pred_fallthru
        _
      %p1598 = scmp.le.s32.totalorder 2, %s26
      // Predicated region
      $region105: #{encoder_ve_t_forward.1} parent=5 // pred_check
        %p1599 = pneg %p1598
      $region106: #{encoder_ve_t_forward.1} parent=5 // pred_check_branch
        %1601 = sbr.rel (%p1599) target = $region108
      $region107: #{encoder_ve_t_forward.1} parent=5 // pred_region
        %s1602 = ssub.s32 %s26, 2
      $region108: #{encoder_ve_t_forward.1} parent=5 // pred_fallthru
        _
    $region6: #{encoder_ve_t_forward.1} parent=1 // loop_footer
      %s30 = sadd.s32 1, %s26
    $region7: #{encoder_ve_t_forward.1} parent=1 // loop_footer_branch
      %25 = sbr.rel target = $region3
    $region8: #{encoder_ve_t_forward.1} parent=1 // loop_exit
      _
    %1603 = vsyncpa [#allocation5], 1
    %s1604 = scalar_lea.sflag [#allocation5], 1
    %1605 = vsyncpa %s1604, 1
    %1606 = vsyncpa [#allocation8], 1
    %1607 = vsyncpa [#allocation6], 1
    %s1608 = scalar_lea.sflag [#allocation6], 1
    %1609 = vsyncpa %s1608, 1
    %1610 = vsyncpa [#allocation12], 1

</llo_original>
